<compile_context>
chip_gen: v6e
topology: v6e:2x2x1
jax: 0.10.0
libtpu: 0.0.40
codegen_flags: <defaults>
</compile_context>

<pallas_src>
import functools
import math

import jax
import jax.numpy as jnp
from jax import lax
from jax.experimental import pallas as pl
from jax.experimental.pallas import tpu as pltpu

_EPS = 1e-5
_LANE = 128


# ------------------------------ tile helpers ------------------------------- #

def _round_up(x, m):
    return (x + m - 1) // m * m


def _row_tiling(m, target=512):
    """Return (tm, m_pad): tm is a multiple of 8 that divides m_pad (>= m).

    Prefers an exact divisor of m (no padding) and >= 2 row tiles so the
    'parallel' M axis can split across the two v7x TensorCores; never falls
    back to a single full-M tile (the old VMEM-blowup failure mode)."""
    if m <= 8:
        return 8, 8
    half = _round_up(-(-m // 2), 8)          # ceil(m/2) rounded to 8
    limit = max(8, min(target, half))
    limit -= limit % 8
    for cand in range(limit, 7, -8):
        if m % cand == 0:
            return cand, m
    return limit, _round_up(m, limit)


def _pick_tk(k, n, *, resident_bytes=4 * 1024 * 1024, target=2048):
    """K tile.  Keep the whole weight resident (tk == K) when it fits
    comfortably in VMEM (B's block index becomes constant -> DMA'd once).
    Otherwise split K, preferring 256-multiples (v6e/v7x MXU width)."""
    if k * n * 2 <= resident_bytes or k % _LANE != 0:
        return k
    for step in (256, 128):
        start = min(target, k)
        start -= start % step
        for cand in range(start, step - 1, -step):
            if k % cand == 0:
                return cand
    return k


# ----------------------------- Pallas kernels ------------------------------ #

def _conv_mm_stats_single_k_kernel(a_ref, b_ref, o_ref, psum_ref, pssq_ref):
    """One-shot matmul tile (whole K resident) + fused per-channel BN sums."""
    acc = jnp.dot(a_ref[...], b_ref[...], preferred_element_type=jnp.float32)
    o_ref[...] = acc.astype(o_ref.dtype)
    s = jnp.sum(acc, axis=0, keepdims=True)            # (1, N)
    sq = jnp.sum(acc * acc, axis=0, keepdims=True)     # (1, N)
    psum_ref[...] = jnp.broadcast_to(s, psum_ref.shape)
    pssq_ref[...] = jnp.broadcast_to(sq, pssq_ref.shape)


def _conv_mm_stats_multi_k_kernel(a_ref, b_ref, o_ref, psum_ref, pssq_ref,
                                  acc_ref):
    """K-tiled matmul with f32 accumulator + fused per-channel BN sums."""
    k = pl.program_id(1)

    @pl.when(k == 0)
    def _init():
        acc_ref[...] = jnp.zeros_like(acc_ref)

    acc_ref[...] += jnp.dot(a_ref[...], b_ref[...],
                            preferred_element_type=jnp.float32)

    @pl.when(k == pl.num_programs(1) - 1)
    def _finalize():
        acc = acc_ref[...]
        o_ref[...] = acc.astype(o_ref.dtype)
        s = jnp.sum(acc, axis=0, keepdims=True)
        sq = jnp.sum(acc * acc, axis=0, keepdims=True)
        psum_ref[...] = jnp.broadcast_to(s, psum_ref.shape)
        pssq_ref[...] = jnp.broadcast_to(sq, pssq_ref.shape)


def conv_matmul_stats(a, b, *, tm, out_dtype=jnp.bfloat16):
    """(M, K) @ (K, N) -> (raw output, per-channel sum, per-channel sum-sq).

    bf16 MXU inputs / f32 accumulation.  N must be a multiple of 128 and
    M a multiple of tm (caller pads rows with zeros, which leave the BN sums
    untouched)."""
    a = a.astype(jnp.bfloat16)
    b = b.astype(jnp.bfloat16)
    M, K = a.shape
    K2, N = b.shape
    assert K == K2 and N % _LANE == 0 and M % tm == 0
    tk = _pick_tk(K, N)
    m_tiles = M // tm
    k_tiles = K // tk

    out_shapes = (
        jax.ShapeDtypeStruct((M, N), out_dtype),
        jax.ShapeDtypeStruct((m_tiles * 8, N), jnp.float32),
        jax.ShapeDtypeStruct((m_tiles * 8, N), jnp.float32),
    )

    if k_tiles == 1:
        out, psum, pssq = pl.pallas_call(
            _conv_mm_stats_single_k_kernel,
            out_shape=out_shapes,
            grid=(m_tiles,),
            in_specs=[pl.BlockSpec((tm, K), lambda i: (i, 0)),
                      pl.BlockSpec((K, N), lambda i: (0, 0))],
            out_specs=(pl.BlockSpec((tm, N), lambda i: (i, 0)),
                       pl.BlockSpec((8, N), lambda i: (i, 0)),
                       pl.BlockSpec((8, N), lambda i: (i, 0))),
            compiler_params=pltpu.CompilerParams(
                dimension_semantics=("parallel",)),
        )(a, b)
    else:
        out, psum, pssq = pl.pallas_call(
            _conv_mm_stats_multi_k_kernel,
            out_shape=out_shapes,
            grid=(m_tiles, k_tiles),
            in_specs=[pl.BlockSpec((tm, tk), lambda i, k: (i, k)),
                      pl.BlockSpec((tk, N), lambda i, k: (k, 0))],
            out_specs=(pl.BlockSpec((tm, N), lambda i, k: (i, 0)),
                       pl.BlockSpec((8, N), lambda i, k: (i, 0)),
                       pl.BlockSpec((8, N), lambda i, k: (i, 0))),
            scratch_shapes=[pltpu.VMEM((tm, N), jnp.float32)],
            compiler_params=pltpu.CompilerParams(
                dimension_semantics=("parallel", "arbitrary")),
        )(a, b)

    # the 8 rows of each per-tile stats block are identical; tiny JAX reduce.
    col_sum = psum.reshape(m_tiles, 8, N)[:, 0, :].sum(axis=0)
    col_ssq = pssq.reshape(m_tiles, 8, N)[:, 0, :].sum(axis=0)
    return out, col_sum, col_ssq


def _bn2_add_relu_kernel(x_ref, r_ref, s2_ref, b2_ref, sr_ref, br_ref, o_ref):
    y = x_ref[...].astype(jnp.float32) * s2_ref[...] + b2_ref[...]
    r = r_ref[...].astype(jnp.float32) * sr_ref[...] + br_ref[...]
    o_ref[...] = jnp.maximum(y + r, 0.0).astype(o_ref.dtype)


def pallas_bn_add_relu(x, res, s2, b2, sr, br, *, tm, out_dtype=jnp.bfloat16):
    """relu(bn2(conv2_out) + bn_d(residual)) in one fused pass on (M, Cp)."""
    M, C = x.shape
    assert res.shape == (M, C) and M % tm == 0
    return pl.pallas_call(
        _bn2_add_relu_kernel,
        out_shape=jax.ShapeDtypeStruct((M, C), out_dtype),
        grid=(M // tm,),
        in_specs=[pl.BlockSpec((tm, C), lambda i: (i, 0)),
                  pl.BlockSpec((tm, C), lambda i: (i, 0)),
                  pl.BlockSpec((1, C), lambda i: (0, 0)),
                  pl.BlockSpec((1, C), lambda i: (0, 0)),
                  pl.BlockSpec((1, C), lambda i: (0, 0)),
                  pl.BlockSpec((1, C), lambda i: (0, 0))],
        out_specs=pl.BlockSpec((tm, C), lambda i: (i, 0)),
        compiler_params=pltpu.CompilerParams(dimension_semantics=("parallel",)),
    )(x, res, s2, b2, sr, br)


# ------------------------------- JAX glue ---------------------------------- #

def _im2col(x_nhwc, ksize, stride, pad):
    """NHWC -> (N*Ho*Wo, ksize*ksize*C) patches (row-major over kh, kw, c)."""
    N, H, W, C = x_nhwc.shape
    xp = jnp.pad(x_nhwc, ((0, 0), (pad, pad), (pad, pad), (0, 0)))
    Ho = (H + 2 * pad - ksize) // stride + 1
    Wo = (W + 2 * pad - ksize) // stride + 1
    patches = []
    for i in range(ksize):
        for j in range(ksize):
            patches.append(xp[:, i:i + stride * Ho:stride,
                              j:j + stride * Wo:stride, :])
    cols = jnp.stack(patches, axis=3)            # (N, Ho, Wo, k*k, C)
    return cols.reshape(N * Ho * Wo, ksize * ksize * C), (Ho, Wo)


def _pad_rows(a, m_pad):
    m = a.shape[0]
    if m_pad == m:
        return a
    return jnp.pad(a, ((0, m_pad - m), (0, 0)))


def _conv_weight_to_mat(w_oihw, c_out_pad, c_in_pad=None):
    """torch (O, I, kh, kw) -> bf16 ((kh*kw*Ipad), Opad) matching _im2col order."""
    O, I, kh, kw = w_oihw.shape
    c_in_pad = I if c_in_pad is None else c_in_pad
    w = jnp.pad(w_oihw, ((0, c_out_pad - O), (0, c_in_pad - I), (0, 0), (0, 0)))
    w = jnp.transpose(w, (2, 3, 1, 0)).reshape(kh * kw * c_in_pad, c_out_pad)
    return w.astype(jnp.bfloat16)


def _bn_from_sums(col_sum, col_ssq, count, gamma, beta, c_real, c_pad):
    """Training-mode BN (biased batch var) scale/shift from fused matmul sums.

    Note: E[x^2]-E[x]^2 in f32 from the f32 MXU accumulator; guarded with
    max(.,0) against cancellation (adequate at these activation scales)."""
    mean = col_sum[:c_real] / count
    var = jnp.maximum(col_ssq[:c_real] / count - mean * mean, 0.0)
    scale = gamma / jnp.sqrt(var + _EPS)
    shift = beta - mean * scale
    scale = jnp.pad(scale, (0, c_pad - c_real))   # padded lanes -> 0 (inert)
    shift = jnp.pad(shift, (0, c_pad - c_real))
    return scale[None, :], shift[None, :]


def init_basic_block_params(key, in_planes, planes, stride):
    ks = jax.random.split(key, 6)

    def conv_init(k, shape):
        fan_in = shape[1] * shape[2] * shape[3]
        bound = 1.0 / math.sqrt(fan_in)
        return jax.random.uniform(k, shape, jnp.float32, -bound, bound)

    params = {
        "w1": conv_init(ks[0], (planes, in_planes, 3, 3)),
        "gamma1": 1.0 + 0.1 * jax.random.normal(ks[1], (planes,), jnp.float32),
        "beta1": 0.1 * jax.random.normal(ks[2], (planes,), jnp.float32),
        "w2": conv_init(ks[3], (planes, planes, 3, 3)),
        "gamma2": 1.0 + 0.1 * jax.random.normal(ks[4], (planes,), jnp.float32),
        "beta2": 0.1 * jax.random.normal(ks[5], (planes,), jnp.float32),
    }
    if stride != 1 or in_planes != planes:
        kd = jax.random.split(ks[0], 3)
        params["wd"] = conv_init(kd[0], (planes, in_planes, 1, 1))
        params["gammad"] = 1.0 + 0.1 * jax.random.normal(kd[1], (planes,), jnp.float32)
        params["betad"] = 0.1 * jax.random.normal(kd[2], (planes,), jnp.float32)
    return params


@functools.partial(jax.jit, static_argnums=(2,))
def basic_block_forward(x_nchw, params, stride):
    """Pallas implementation of BasicBlock.forward (unpruned path)."""
    # TODO(synk): pruned-channel path (conv.in_indices / speed_tensor scatter) is
    # PyTorch-side stateful bookkeeping that never triggers on a fresh module.
    # TODO(synk): im2col still materializes the 9x patch expansion (now bf16);
    # a further multi-x win is an in-kernel direct 3x3 conv (halo-row loads +
    # 9 shifted MXU taps) that removes the expansion entirely.
    x = jnp.transpose(x_nchw, (0, 2, 3, 1)).astype(jnp.bfloat16)   # NHWC bf16
    N, H, W, Cin = x.shape
    planes = params["w1"].shape[0]
    Cp = _round_up(planes, _LANE)            # lane-dense output channels

    # conv1 (3x3, stride, pad=1); BN stats fused into the matmul epilogue.
    cols1, (Ho, Wo) = _im2col(x, 3, stride, 1)          # bf16 patch slab
    M1 = N * Ho * Wo
    tm, Mp = _row_tiling(M1)
    cols1 = _pad_rows(cols1, Mp)
    out1_raw, s1_sum, s1_ssq = conv_matmul_stats(
        cols1, _conv_weight_to_mat(params["w1"], Cp), tm=tm)
    sc1, sh1 = _bn_from_sums(s1_sum, s1_ssq, M1,
                             params["gamma1"], params["beta1"], planes, Cp)

    # bn1 + ReLU: plain jnp elementwise right before conv2's im2col so XLA
    # fuses it into the patch gather (no separate HBM pass); conv2's zero
    # padding is applied AFTER the ReLU, matching the PyTorch order.
    act1 = jnp.maximum(out1_raw[:M1].astype(jnp.float32) * sc1 + sh1, 0.0)
    act1 = act1.astype(jnp.bfloat16).reshape(N, Ho, Wo, Cp)

    # conv2 (3x3, stride=1, pad=1); bn2 applied fused with residual below.
    cols2, _ = _im2col(act1, 3, 1, 1)
    cols2 = _pad_rows(cols2, Mp)
    out2_raw, s2_sum, s2_ssq = conv_matmul_stats(
        cols2, _conv_weight_to_mat(params["w2"], Cp, c_in_pad=Cp), tm=tm)
    sc2, sh2 = _bn_from_sums(s2_sum, s2_ssq, M1,
                             params["gamma2"], params["beta2"], planes, Cp)

    # residual branch
    if "wd" in params:
        xs = _pad_rows(x[:, ::stride, ::stride, :].reshape(M1, Cin), Mp)
        res_raw, sd_sum, sd_ssq = conv_matmul_stats(
            xs, _conv_weight_to_mat(params["wd"], Cp), tm=tm)
        scd, shd = _bn_from_sums(sd_sum, sd_ssq, M1,
                                 params["gammad"], params["betad"], planes, Cp)
        residual = res_raw
    else:
        # TODO(synk): zero-extend the identity residual to Cp lanes inside the
        # fused kernel instead of this (bf16) jnp.pad copy.
        residual = jnp.pad(x.reshape(M1, Cin),
                           ((0, Mp - M1), (0, Cp - Cin)))
        scd = jnp.ones((1, Cp), jnp.float32)
        shd = jnp.zeros((1, Cp), jnp.float32)

    # out = relu(bn2(conv2) + bn_d(residual)) -- single fused pass, bf16 out.
    out = pallas_bn_add_relu(out2_raw, residual, sc2, sh2, scd, shd, tm=tm)
    out = out[:M1].reshape(N, Ho, Wo, Cp)[..., :planes]
    # transpose on bf16; convert to f32 in the same fused XLA pass.
    return jnp.transpose(out, (0, 3, 1, 2)).astype(jnp.float32)   # NCHW


# --------------------------- pure-JAX reference ----------------------------- #

def _ref_bn(x_nchw, gamma, beta):
    mean = x_nchw.mean(axis=(0, 2, 3))
    var = x_nchw.var(axis=(0, 2, 3))
    return ((x_nchw - mean[None, :, None, None])
            / jnp.sqrt(var + _EPS)[None, :, None, None]
            * gamma[None, :, None, None] + beta[None, :, None, None])


def ref_forward(x, params, stride):
    conv = lambda x_, w, s, p: lax.conv_general_dilated(
        x_, w, (s, s), ((p, p), (p, p)),
        dimension_numbers=("NCHW", "OIHW", "NCHW"))
    out = conv(x, params["w1"], stride, 1)
    out = jax.nn.relu(_ref_bn(out, params["gamma1"], params["beta1"]))
    out = conv(out, params["w2"], 1, 1)
    out = _ref_bn(out, params["gamma2"], params["beta2"])
    if "wd" in params:
        res = conv(x, params["wd"], stride, 0)
        res = _ref_bn(res, params["gammad"], params["betad"])
    else:
        res = x
    return jax.nn.relu(out + res)


# ----------------------------------- main ----------------------------------- #

if __name__ == "__main__":
    key = jax.random.PRNGKey(0)

    configs = [
        # (N, in_planes, planes, H, W, stride)
        (2, 4, 8, 16, 16, 2),   # downsample branch
        (2, 8, 8, 16, 16, 1),   # identity residual branch
    ]
    for idx, (N, cin, planes, H, W, stride) in enumerate(configs):
        k_x, k_p, key = jax.random.split(key, 3)
        x = jax.random.normal(k_x, (N, cin, H, W), jnp.float32)
        params = init_basic_block_params(k_p, cin, planes, stride)

        out = jax.block_until_ready(basic_block_forward(x, params, stride))
        ref = jax.block_until_ready(ref_forward(x, params, stride))

        assert out.shape == ref.shape == (N, planes, H // stride, W // stride)
        # bf16 MXU inputs / activations (f32 accumulation) -> tolerance
        # deliberately loosened vs. the f32 lax.conv reference; layout or
        # semantic bugs would give O(1) error.
        err = float(jnp.max(jnp.abs(out - ref)))
        assert err < 1e-1, (idx, err)

    print("KERNEL_OK")
</pallas_src>

<mosaic_0001>
module attributes {stable_mosaic.version = 11 : i64} {
  func.func @_conv_mm_stats_single_k_kernel(%arg0: i32, %arg1: memref<64x36xbf16, #tpu.memory_space<vmem>>, %arg2: memref<36x128xbf16, #tpu.memory_space<vmem>>, %arg3: memref<64x128xbf16, #tpu.memory_space<vmem>>, %arg4: memref<8x128xf32, #tpu.memory_space<vmem>>, %arg5: memref<8x128xf32, #tpu.memory_space<vmem>>) attributes {dimension_semantics = [#tpu.dimension_semantics<parallel>], iteration_bounds = array<i64: 2>, scalar_prefetch = 0 : i64, scratch_operands = 0 : i64, tpu.core_type = #tpu.core_type<tc>, window_params = [{transform_indices = @transform_0, window_bounds = array<i64: 64, 36>}, {pipeline_mode = #tpu.pipeline_mode<synchronous>, transform_indices = @transform_1, window_bounds = array<i64: 36, 128>}, {transform_indices = @transform_2, window_bounds = array<i64: 64, 128>}, {transform_indices = @transform_3, window_bounds = array<i64: 8, 128>}, {transform_indices = @transform_4, window_bounds = array<i64: 8, 128>}]} {
    %c0 = arith.constant 0 : index
    %c0_0 = arith.constant 0 : index
    %0 = vector.load %arg1[%c0, %c0_0] : memref<64x36xbf16, #tpu.memory_space<vmem>>, vector<64x36xbf16>
    %c0_1 = arith.constant 0 : index
    %c0_2 = arith.constant 0 : index
    %1 = vector.load %arg2[%c0_1, %c0_2] : memref<36x128xbf16, #tpu.memory_space<vmem>>, vector<36x128xbf16>
    %cst = arith.constant dense<0.000000e+00> : vector<64x128xf32>
    %2 = tpu.matmul %0, %1, %cst {dimension_numbers = #tpu.dot_dimension_numbers<[1], [0], [0], [1], [0, 0, 1, 1], [], []>} : vector<64x36xbf16>, vector<36x128xbf16>, vector<64x128xf32> -> vector<64x128xf32>
    %3 = arith.truncf %2 : vector<64x128xf32> to vector<64x128xbf16>
    %c0_3 = arith.constant 0 : index
    %c0_4 = arith.constant 0 : index
    %4 = vector.load %arg3[%c0_3, %c0_4] : memref<64x128xbf16, #tpu.memory_space<vmem>>, vector<64x128xbf16>
    tpu.vector_store %arg3[%c0_3, %c0_4], %3 {strides = array<i32>} : memref<64x128xbf16, #tpu.memory_space<vmem>>, vector<64x128xbf16>,
    %cst_5 = arith.constant dense<0.000000e+00> : vector<128xf32>
    %5 = vector.multi_reduction <add>, %2, %cst_5 [0] : vector<64x128xf32> to vector<128xf32>
    %6 = vector.shape_cast %5 : vector<128xf32> to vector<1x128xf32>
    %7 = arith.mulf %2, %2 : vector<64x128xf32>
    %cst_6 = arith.constant dense<0.000000e+00> : vector<128xf32>
    %8 = vector.multi_reduction <add>, %7, %cst_6 [0] : vector<64x128xf32> to vector<128xf32>
    %9 = vector.shape_cast %8 : vector<128xf32> to vector<1x128xf32>
    %10 = vector.shape_cast %6 : vector<1x128xf32> to vector<1x128xf32>
    %11 = vector.broadcast %10 : vector<1x128xf32> to vector<8x128xf32>
    %c0_7 = arith.constant 0 : index
    %c0_8 = arith.constant 0 : index
    %12 = vector.load %arg4[%c0_7, %c0_8] : memref<8x128xf32, #tpu.memory_space<vmem>>, vector<8x128xf32>
    tpu.vector_store %arg4[%c0_7, %c0_8], %11 {strides = array<i32>} : memref<8x128xf32, #tpu.memory_space<vmem>>, vector<8x128xf32>,
    %13 = vector.shape_cast %9 : vector<1x128xf32> to vector<1x128xf32>
    %14 = vector.broadcast %13 : vector<1x128xf32> to vector<8x128xf32>
    %c0_9 = arith.constant 0 : index
    %c0_10 = arith.constant 0 : index
    %15 = vector.load %arg5[%c0_9, %c0_10] : memref<8x128xf32, #tpu.memory_space<vmem>>, vector<8x128xf32>
    tpu.vector_store %arg5[%c0_9, %c0_10], %14 {strides = array<i32>} : memref<8x128xf32, #tpu.memory_space<vmem>>, vector<8x128xf32>,
    return
  }
  func.func @transform_0(%arg0: i32) -> (i32, i32) {
    %c0_i32 = arith.constant 0 : i32
    %c0_i32_0 = arith.constant 0 : i32
    return %arg0, %c0_i32 : i32, i32
  }
  func.func @transform_1(%arg0: i32) -> (i32, i32) {
    %c0_i32 = arith.constant 0 : i32
    %c0_i32_0 = arith.constant 0 : i32
    %c0_i32_1 = arith.constant 0 : i32
    return %c0_i32, %c0_i32_0 : i32, i32
  }
  func.func @transform_2(%arg0: i32) -> (i32, i32) {
    %c0_i32 = arith.constant 0 : i32
    %c0_i32_0 = arith.constant 0 : i32
    return %arg0, %c0_i32 : i32, i32
  }
  func.func @transform_3(%arg0: i32) -> (i32, i32) {
    %c0_i32 = arith.constant 0 : i32
    %c0_i32_0 = arith.constant 0 : i32
    return %arg0, %c0_i32 : i32, i32
  }
  func.func @transform_4(%arg0: i32) -> (i32, i32) {
    %c0_i32 = arith.constant 0 : i32
    %c0_i32_0 = arith.constant 0 : i32
    return %arg0, %c0_i32 : i32, i32
  }
}

module attributes {stable_mosaic.version = 11 : i64} {
  func.func @_conv_mm_stats_single_k_kernel(%arg0: i32, %arg1: memref<64x1152xbf16, #tpu.memory_space<vmem>>, %arg2: memref<1152x128xbf16, #tpu.memory_space<vmem>>, %arg3: memref<64x128xbf16, #tpu.memory_space<vmem>>, %arg4: memref<8x128xf32, #tpu.memory_space<vmem>>, %arg5: memref<8x128xf32, #tpu.memory_space<vmem>>) attributes {dimension_semantics = [#tpu.dimension_semantics<parallel>], iteration_bounds = array<i64: 2>, scalar_prefetch = 0 : i64, scratch_operands = 0 : i64, tpu.core_type = #tpu.core_type<tc>, window_params = [{transform_indices = @transform_0, window_bounds = array<i64: 64, 1152>}, {pipeline_mode = #tpu.pipeline_mode<synchronous>, transform_indices = @transform_1, window_bounds = array<i64: 1152, 128>}, {transform_indices = @transform_2, window_bounds = array<i64: 64, 128>}, {transform_indices = @transform_3, window_bounds = array<i64: 8, 128>}, {transform_indices = @transform_4, window_bounds = array<i64: 8, 128>}]} {
    %c0 = arith.constant 0 : index
    %c0_0 = arith.constant 0 : index
    %0 = vector.load %arg1[%c0, %c0_0] : memref<64x1152xbf16, #tpu.memory_space<vmem>>, vector<64x1152xbf16>
    %c0_1 = arith.constant 0 : index
    %c0_2 = arith.constant 0 : index
    %1 = vector.load %arg2[%c0_1, %c0_2] : memref<1152x128xbf16, #tpu.memory_space<vmem>>, vector<1152x128xbf16>
    %cst = arith.constant dense<0.000000e+00> : vector<64x128xf32>
    %2 = tpu.matmul %0, %1, %cst {dimension_numbers = #tpu.dot_dimension_numbers<[1], [0], [0], [1], [0, 0, 1, 1], [], []>} : vector<64x1152xbf16>, vector<1152x128xbf16>, vector<64x128xf32> -> vector<64x128xf32>
    %3 = arith.truncf %2 : vector<64x128xf32> to vector<64x128xbf16>
    %c0_3 = arith.constant 0 : index
    %c0_4 = arith.constant 0 : index
    %4 = vector.load %arg3[%c0_3, %c0_4] : memref<64x128xbf16, #tpu.memory_space<vmem>>, vector<64x128xbf16>
    tpu.vector_store %arg3[%c0_3, %c0_4], %3 {strides = array<i32>} : memref<64x128xbf16, #tpu.memory_space<vmem>>, vector<64x128xbf16>,
    %cst_5 = arith.constant dense<0.000000e+00> : vector<128xf32>
    %5 = vector.multi_reduction <add>, %2, %cst_5 [0] : vector<64x128xf32> to vector<128xf32>
    %6 = vector.shape_cast %5 : vector<128xf32> to vector<1x128xf32>
    %7 = arith.mulf %2, %2 : vector<64x128xf32>
    %cst_6 = arith.constant dense<0.000000e+00> : vector<128xf32>
    %8 = vector.multi_reduction <add>, %7, %cst_6 [0] : vector<64x128xf32> to vector<128xf32>
    %9 = vector.shape_cast %8 : vector<128xf32> to vector<1x128xf32>
    %10 = vector.shape_cast %6 : vector<1x128xf32> to vector<1x128xf32>
    %11 = vector.broadcast %10 : vector<1x128xf32> to vector<8x128xf32>
    %c0_7 = arith.constant 0 : index
    %c0_8 = arith.constant 0 : index
    %12 = vector.load %arg4[%c0_7, %c0_8] : memref<8x128xf32, #tpu.memory_space<vmem>>, vector<8x128xf32>
    tpu.vector_store %arg4[%c0_7, %c0_8], %11 {strides = array<i32>} : memref<8x128xf32, #tpu.memory_space<vmem>>, vector<8x128xf32>,
    %13 = vector.shape_cast %9 : vector<1x128xf32> to vector<1x128xf32>
    %14 = vector.broadcast %13 : vector<1x128xf32> to vector<8x128xf32>
    %c0_9 = arith.constant 0 : index
    %c0_10 = arith.constant 0 : index
    %15 = vector.load %arg5[%c0_9, %c0_10] : memref<8x128xf32, #tpu.memory_space<vmem>>, vector<8x128xf32>
    tpu.vector_store %arg5[%c0_9, %c0_10], %14 {strides = array<i32>} : memref<8x128xf32, #tpu.memory_space<vmem>>, vector<8x128xf32>,
    return
  }
  func.func @transform_0(%arg0: i32) -> (i32, i32) {
    %c0_i32 = arith.constant 0 : i32
    %c0_i32_0 = arith.constant 0 : i32
    return %arg0, %c0_i32 : i32, i32
  }
  func.func @transform_1(%arg0: i32) -> (i32, i32) {
    %c0_i32 = arith.constant 0 : i32
    %c0_i32_0 = arith.constant 0 : i32
    %c0_i32_1 = arith.constant 0 : i32
    return %c0_i32, %c0_i32_0 : i32, i32
  }
  func.func @transform_2(%arg0: i32) -> (i32, i32) {
    %c0_i32 = arith.constant 0 : i32
    %c0_i32_0 = arith.constant 0 : i32
    return %arg0, %c0_i32 : i32, i32
  }
  func.func @transform_3(%arg0: i32) -> (i32, i32) {
    %c0_i32 = arith.constant 0 : i32
    %c0_i32_0 = arith.constant 0 : i32
    return %arg0, %c0_i32 : i32, i32
  }
  func.func @transform_4(%arg0: i32) -> (i32, i32) {
    %c0_i32 = arith.constant 0 : i32
    %c0_i32_0 = arith.constant 0 : i32
    return %arg0, %c0_i32 : i32, i32
  }
}

module attributes {stable_mosaic.version = 11 : i64} {
  func.func @_conv_mm_stats_single_k_kernel(%arg0: i32, %arg1: memref<64x4xbf16, #tpu.memory_space<vmem>>, %arg2: memref<4x128xbf16, #tpu.memory_space<vmem>>, %arg3: memref<64x128xbf16, #tpu.memory_space<vmem>>, %arg4: memref<8x128xf32, #tpu.memory_space<vmem>>, %arg5: memref<8x128xf32, #tpu.memory_space<vmem>>) attributes {dimension_semantics = [#tpu.dimension_semantics<parallel>], iteration_bounds = array<i64: 2>, scalar_prefetch = 0 : i64, scratch_operands = 0 : i64, tpu.core_type = #tpu.core_type<tc>, window_params = [{transform_indices = @transform_0, window_bounds = array<i64: 64, 4>}, {pipeline_mode = #tpu.pipeline_mode<synchronous>, transform_indices = @transform_1, window_bounds = array<i64: 4, 128>}, {transform_indices = @transform_2, window_bounds = array<i64: 64, 128>}, {transform_indices = @transform_3, window_bounds = array<i64: 8, 128>}, {transform_indices = @transform_4, window_bounds = array<i64: 8, 128>}]} {
    %c0 = arith.constant 0 : index
    %c0_0 = arith.constant 0 : index
    %0 = vector.load %arg1[%c0, %c0_0] : memref<64x4xbf16, #tpu.memory_space<vmem>>, vector<64x4xbf16>
    %c0_1 = arith.constant 0 : index
    %c0_2 = arith.constant 0 : index
    %1 = vector.load %arg2[%c0_1, %c0_2] : memref<4x128xbf16, #tpu.memory_space<vmem>>, vector<4x128xbf16>
    %cst = arith.constant dense<0.000000e+00> : vector<64x128xf32>
    %2 = tpu.matmul %0, %1, %cst {dimension_numbers = #tpu.dot_dimension_numbers<[1], [0], [0], [1], [0, 0, 1, 1], [], []>} : vector<64x4xbf16>, vector<4x128xbf16>, vector<64x128xf32> -> vector<64x128xf32>
    %3 = arith.truncf %2 : vector<64x128xf32> to vector<64x128xbf16>
    %c0_3 = arith.constant 0 : index
    %c0_4 = arith.constant 0 : index
    %4 = vector.load %arg3[%c0_3, %c0_4] : memref<64x128xbf16, #tpu.memory_space<vmem>>, vector<64x128xbf16>
    tpu.vector_store %arg3[%c0_3, %c0_4], %3 {strides = array<i32>} : memref<64x128xbf16, #tpu.memory_space<vmem>>, vector<64x128xbf16>,
    %cst_5 = arith.constant dense<0.000000e+00> : vector<128xf32>
    %5 = vector.multi_reduction <add>, %2, %cst_5 [0] : vector<64x128xf32> to vector<128xf32>
    %6 = vector.shape_cast %5 : vector<128xf32> to vector<1x128xf32>
    %7 = arith.mulf %2, %2 : vector<64x128xf32>
    %cst_6 = arith.constant dense<0.000000e+00> : vector<128xf32>
    %8 = vector.multi_reduction <add>, %7, %cst_6 [0] : vector<64x128xf32> to vector<128xf32>
    %9 = vector.shape_cast %8 : vector<128xf32> to vector<1x128xf32>
    %10 = vector.shape_cast %6 : vector<1x128xf32> to vector<1x128xf32>
    %11 = vector.broadcast %10 : vector<1x128xf32> to vector<8x128xf32>
    %c0_7 = arith.constant 0 : index
    %c0_8 = arith.constant 0 : index
    %12 = vector.load %arg4[%c0_7, %c0_8] : memref<8x128xf32, #tpu.memory_space<vmem>>, vector<8x128xf32>
    tpu.vector_store %arg4[%c0_7, %c0_8], %11 {strides = array<i32>} : memref<8x128xf32, #tpu.memory_space<vmem>>, vector<8x128xf32>,
    %13 = vector.shape_cast %9 : vector<1x128xf32> to vector<1x128xf32>
    %14 = vector.broadcast %13 : vector<1x128xf32> to vector<8x128xf32>
    %c0_9 = arith.constant 0 : index
    %c0_10 = arith.constant 0 : index
    %15 = vector.load %arg5[%c0_9, %c0_10] : memref<8x128xf32, #tpu.memory_space<vmem>>, vector<8x128xf32>
    tpu.vector_store %arg5[%c0_9, %c0_10], %14 {strides = array<i32>} : memref<8x128xf32, #tpu.memory_space<vmem>>, vector<8x128xf32>,
    return
  }
  func.func @transform_0(%arg0: i32) -> (i32, i32) {
    %c0_i32 = arith.constant 0 : i32
    %c0_i32_0 = arith.constant 0 : i32
    return %arg0, %c0_i32 : i32, i32
  }
  func.func @transform_1(%arg0: i32) -> (i32, i32) {
    %c0_i32 = arith.constant 0 : i32
    %c0_i32_0 = arith.constant 0 : i32
    %c0_i32_1 = arith.constant 0 : i32
    return %c0_i32, %c0_i32_0 : i32, i32
  }
  func.func @transform_2(%arg0: i32) -> (i32, i32) {
    %c0_i32 = arith.constant 0 : i32
    %c0_i32_0 = arith.constant 0 : i32
    return %arg0, %c0_i32 : i32, i32
  }
  func.func @transform_3(%arg0: i32) -> (i32, i32) {
    %c0_i32 = arith.constant 0 : i32
    %c0_i32_0 = arith.constant 0 : i32
    return %arg0, %c0_i32 : i32, i32
  }
  func.func @transform_4(%arg0: i32) -> (i32, i32) {
    %c0_i32 = arith.constant 0 : i32
    %c0_i32_0 = arith.constant 0 : i32
    return %arg0, %c0_i32 : i32, i32
  }
}

module attributes {stable_mosaic.version = 11 : i64} {
  func.func @_bn2_add_relu_kernel(%arg0: i32, %arg1: memref<64x128xbf16, #tpu.memory_space<vmem>>, %arg2: memref<64x128xbf16, #tpu.memory_space<vmem>>, %arg3: memref<1x128xf32, #tpu.memory_space<vmem>>, %arg4: memref<1x128xf32, #tpu.memory_space<vmem>>, %arg5: memref<1x128xf32, #tpu.memory_space<vmem>>, %arg6: memref<1x128xf32, #tpu.memory_space<vmem>>, %arg7: memref<64x128xbf16, #tpu.memory_space<vmem>>) attributes {dimension_semantics = [#tpu.dimension_semantics<parallel>], iteration_bounds = array<i64: 2>, scalar_prefetch = 0 : i64, scratch_operands = 0 : i64, tpu.core_type = #tpu.core_type<tc>, window_params = [{transform_indices = @transform_0, window_bounds = array<i64: 64, 128>}, {transform_indices = @transform_1, window_bounds = array<i64: 64, 128>}, {pipeline_mode = #tpu.pipeline_mode<synchronous>, transform_indices = @transform_2, window_bounds = array<i64: 1, 128>}, {pipeline_mode = #tpu.pipeline_mode<synchronous>, transform_indices = @transform_3, window_bounds = array<i64: 1, 128>}, {pipeline_mode = #tpu.pipeline_mode<synchronous>, transform_indices = @transform_4, window_bounds = array<i64: 1, 128>}, {pipeline_mode = #tpu.pipeline_mode<synchronous>, transform_indices = @transform_5, window_bounds = array<i64: 1, 128>}, {transform_indices = @transform_6, window_bounds = array<i64: 64, 128>}]} {
    %c0 = arith.constant 0 : index
    %c0_0 = arith.constant 0 : index
    %0 = vector.load %arg1[%c0, %c0_0] : memref<64x128xbf16, #tpu.memory_space<vmem>>, vector<64x128xbf16>
    %1 = arith.extf %0 : vector<64x128xbf16> to vector<64x128xf32>
    %c0_1 = arith.constant 0 : index
    %c0_2 = arith.constant 0 : index
    %2 = vector.load %arg3[%c0_1, %c0_2] : memref<1x128xf32, #tpu.memory_space<vmem>>, vector<1x128xf32>
    %3 = vector.broadcast %2 : vector<1x128xf32> to vector<64x128xf32>
    %4 = arith.mulf %1, %3 : vector<64x128xf32>
    %c0_3 = arith.constant 0 : index
    %c0_4 = arith.constant 0 : index
    %5 = vector.load %arg4[%c0_3, %c0_4] : memref<1x128xf32, #tpu.memory_space<vmem>>, vector<1x128xf32>
    %6 = vector.broadcast %5 : vector<1x128xf32> to vector<64x128xf32>
    %7 = arith.addf %4, %6 : vector<64x128xf32>
    %c0_5 = arith.constant 0 : index
    %c0_6 = arith.constant 0 : index
    %8 = vector.load %arg2[%c0_5, %c0_6] : memref<64x128xbf16, #tpu.memory_space<vmem>>, vector<64x128xbf16>
    %9 = arith.extf %8 : vector<64x128xbf16> to vector<64x128xf32>
    %c0_7 = arith.constant 0 : index
    %c0_8 = arith.constant 0 : index
    %10 = vector.load %arg5[%c0_7, %c0_8] : memref<1x128xf32, #tpu.memory_space<vmem>>, vector<1x128xf32>
    %11 = vector.broadcast %10 : vector<1x128xf32> to vector<64x128xf32>
    %12 = arith.mulf %9, %11 : vector<64x128xf32>
    %c0_9 = arith.constant 0 : index
    %c0_10 = arith.constant 0 : index
    %13 = vector.load %arg6[%c0_9, %c0_10] : memref<1x128xf32, #tpu.memory_space<vmem>>, vector<1x128xf32>
    %14 = vector.broadcast %13 : vector<1x128xf32> to vector<64x128xf32>
    %15 = arith.addf %12, %14 : vector<64x128xf32>
    %16 = arith.addf %7, %15 : vector<64x128xf32>
    %cst = arith.constant 0.000000e+00 : f32
    %17 = vector.broadcast %cst : f32 to vector<64x128xf32>
    %18 = arith.maximumf %16, %17 : vector<64x128xf32>
    %19 = arith.truncf %18 : vector<64x128xf32> to vector<64x128xbf16>
    %c0_11 = arith.constant 0 : index
    %c0_12 = arith.constant 0 : index
    %20 = vector.load %arg7[%c0_11, %c0_12] : memref<64x128xbf16, #tpu.memory_space<vmem>>, vector<64x128xbf16>
    tpu.vector_store %arg7[%c0_11, %c0_12], %19 {strides = array<i32>} : memref<64x128xbf16, #tpu.memory_space<vmem>>, vector<64x128xbf16>,
    return
  }
  func.func @transform_0(%arg0: i32) -> (i32, i32) {
    %c0_i32 = arith.constant 0 : i32
    %c0_i32_0 = arith.constant 0 : i32
    return %arg0, %c0_i32 : i32, i32
  }
  func.func @transform_1(%arg0: i32) -> (i32, i32) {
    %c0_i32 = arith.constant 0 : i32
    %c0_i32_0 = arith.constant 0 : i32
    return %arg0, %c0_i32 : i32, i32
  }
  func.func @transform_2(%arg0: i32) -> (i32, i32) {
    %c0_i32 = arith.constant 0 : i32
    %c0_i32_0 = arith.constant 0 : i32
    %c0_i32_1 = arith.constant 0 : i32
    return %c0_i32, %c0_i32_0 : i32, i32
  }
  func.func @transform_3(%arg0: i32) -> (i32, i32) {
    %c0_i32 = arith.constant 0 : i32
    %c0_i32_0 = arith.constant 0 : i32
    %c0_i32_1 = arith.constant 0 : i32
    return %c0_i32, %c0_i32_0 : i32, i32
  }
  func.func @transform_4(%arg0: i32) -> (i32, i32) {
    %c0_i32 = arith.constant 0 : i32
    %c0_i32_0 = arith.constant 0 : i32
    %c0_i32_1 = arith.constant 0 : i32
    return %c0_i32, %c0_i32_0 : i32, i32
  }
  func.func @transform_5(%arg0: i32) -> (i32, i32) {
    %c0_i32 = arith.constant 0 : i32
    %c0_i32_0 = arith.constant 0 : i32
    %c0_i32_1 = arith.constant 0 : i32
    return %c0_i32, %c0_i32_0 : i32, i32
  }
  func.func @transform_6(%arg0: i32) -> (i32, i32) {
    %c0_i32 = arith.constant 0 : i32
    %c0_i32_0 = arith.constant 0 : i32
    return %arg0, %c0_i32 : i32, i32
  }
}

</mosaic_0001>

<llo_original>
// kernel: basic_block_forward.4
$region0: #{basic_block_forward.4}
  #allocation0 [shape = 'u32[]', space=smem, size = 0x4, offset = 0x4, fixed_abs, tag = 'smem constant byte address 0x4 - core index']
  #allocation1 [shape = 'u32[144,128]{1,0:T(1,128)}', space=vmem, size = 0x12000, scoped, tag = 'internal scratch']
  %s0 = inlined_call_operand.vmem [shape: bf16[128,36], index: 0, kind: input, shape index: {}]
  %s1 = inlined_call_operand.vmem [shape: bf16[36,128], index: 1, kind: input, shape index: {}]
  %s2 = inlined_call_operand.vmem [shape: bf16[128,128], index: 2, kind: output, shape index: {0}]
  %s3 = inlined_call_operand.vmem [shape: f32[16,128], index: 3, kind: output, shape index: {1}]
  %s4 = inlined_call_operand.vmem [shape: f32[16,128], index: 4, kind: output, shape index: {2}]
  %5 = xla_tuple %s2, %s3, %s4
  %s6 = sld [smem:[#allocation0]]
  $region57: #{basic_block_forward.4} parent=0
    _
  %s8 = ssub.s32 1, %s6
  %s9 = scalar_select 0, %s8, %s6
  loop: start=0, step=1, limit=4
  $region2: #{basic_block_forward.4} parent=0 // loop_pre_header
    _
  $region3: #{basic_block_forward.4} parent=0 // loop_header
    %s11 = sphi 0, %s15
    %p12 = scmp.ge.s32.totalorder %s11, 4
    %s21 = sphi 0, %s23
    %s24 = sphi 0, %s21
    %s25 = sphi 0, %s24
    %s41 = sphi 0, %s25
    %s45 = sphi 0, %s45
    %s47 = sphi 0, %s45
    %s48 = sphi 0, %s47
    %s62 = sphi 0, %s48
    %s68 = sphi 0, %s70
    %s71 = sphi 0, %s68
    %s72 = sphi 0, %s71
    %s88 = sphi 0, %s72
    %s94 = sphi 0, %s96
    %s97 = sphi 0, %s94
    %s98 = sphi 0, %s97
    %s114 = sphi 0, %s98
    %s120 = sphi 0, %s122
    %s123 = sphi 0, %s120
    %s124 = sphi 0, %s123
    %s140 = sphi 0, %s124
  $region4: #{basic_block_forward.4} parent=0 // loop_header_branch
    %14 = sbr.rel (%p12) target = $region8
  $region5: #{basic_block_forward.4} parent=0 // loop_body
    %s16 = ssub.s32 %s11, 1
    %s17 = ssub.s32 %s11, 2
    %s18 = sadd.s32 %s11, 1
    %s19 = ssub.s32 %s11, %s18
    %p20 = scmp.eq.s32.totalorder %s19, 0
    %s22 = sadd.s32 %s21, 1
    %s23 = scalar_select %p20, %s21, %s22
    %p26 = pneg %p20
    %p27 = scmp.eq.s32.totalorder %s11, 1
    %p28 = por %p26, %p27
    %p29 = scmp.ne.s32.totalorder %s21, %s24
    %p30 = scmp.eq.s32.totalorder %s11, 0
    %p31 = por %p29, %p30
    %p32 = scmp.ne.s32.totalorder %s21, %s24
    %p33 = scmp.eq.s32.totalorder %s16, 1
    %p34 = por %p32, %p33
    %p35 = scmp.ne.s32.totalorder %s24, %s25
    %p36 = scmp.eq.s32.totalorder %s16, 0
    %p37 = por %p35, %p36
    %p38 = scmp.ne.s32.totalorder %s24, %s25
    %p39 = scmp.eq.s32.totalorder %s17, 1
    %p40 = por %p38, %p39
    %p42 = scmp.ne.s32.totalorder %s25, %s41
    %p43 = scmp.eq.s32.totalorder %s17, 0
    %p44 = por %p42, %p43
    %s46 = sadd.s32 %s45, 1
    %p49 = scmp.eq.s32.totalorder %s11, 1
    %p50 = scmp.ne.s32.totalorder %s45, %s47
    %p51 = scmp.eq.s32.totalorder %s11, 0
    %p52 = por %p50, %p51
    %p53 = scmp.ne.s32.totalorder %s45, %s47
    %p54 = scmp.eq.s32.totalorder %s16, 1
    %p55 = por %p53, %p54
    %p56 = scmp.ne.s32.totalorder %s47, %s48
    %p57 = scmp.eq.s32.totalorder %s16, 0
    %p58 = por %p56, %p57
    %p59 = scmp.ne.s32.totalorder %s47, %s48
    %p60 = scmp.eq.s32.totalorder %s17, 1
    %p61 = por %p59, %p60
    %p63 = scmp.ne.s32.totalorder %s48, %s62
    %p64 = scmp.eq.s32.totalorder %s17, 0
    %p65 = por %p63, %p64
    %s66 = ssub.s32 %s11, %s18
    %p67 = scmp.eq.s32.totalorder %s66, 0
    %s69 = sadd.s32 %s68, 1
    %s70 = scalar_select %p67, %s68, %s69
    %p73 = pneg %p67
    %p74 = scmp.eq.s32.totalorder %s11, 1
    %p75 = por %p73, %p74
    %p76 = scmp.ne.s32.totalorder %s68, %s71
    %p77 = scmp.eq.s32.totalorder %s11, 0
    %p78 = por %p76, %p77
    %p79 = scmp.ne.s32.totalorder %s68, %s71
    %p80 = scmp.eq.s32.totalorder %s16, 1
    %p81 = por %p79, %p80
    %p82 = scmp.ne.s32.totalorder %s71, %s72
    %p83 = scmp.eq.s32.totalorder %s16, 0
    %p84 = por %p82, %p83
    %p85 = scmp.ne.s32.totalorder %s71, %s72
    %p86 = scmp.eq.s32.totalorder %s17, 1
    %p87 = por %p85, %p86
    %p89 = scmp.ne.s32.totalorder %s72, %s88
    %p90 = scmp.eq.s32.totalorder %s17, 0
    %p91 = por %p89, %p90
    %s92 = ssub.s32 %s11, %s18
    %p93 = scmp.eq.s32.totalorder %s92, 0
    %s95 = sadd.s32 %s94, 1
    %s96 = scalar_select %p93, %s94, %s95
    %p99 = pneg %p93
    %p100 = scmp.eq.s32.totalorder %s11, 1
    %p101 = por %p99, %p100
    %p102 = scmp.ne.s32.totalorder %s94, %s97
    %p103 = scmp.eq.s32.totalorder %s11, 0
    %p104 = por %p102, %p103
    %p105 = scmp.ne.s32.totalorder %s94, %s97
    %p106 = scmp.eq.s32.totalorder %s16, 1
    %p107 = por %p105, %p106
    %p108 = scmp.ne.s32.totalorder %s97, %s98
    %p109 = scmp.eq.s32.totalorder %s16, 0
    %p110 = por %p108, %p109
    %p111 = scmp.ne.s32.totalorder %s97, %s98
    %p112 = scmp.eq.s32.totalorder %s17, 1
    %p113 = por %p111, %p112
    %p115 = scmp.ne.s32.totalorder %s98, %s114
    %p116 = scmp.eq.s32.totalorder %s17, 0
    %p117 = por %p115, %p116
    %s118 = ssub.s32 %s11, %s18
    %p119 = scmp.eq.s32.totalorder %s118, 0
    %s121 = sadd.s32 %s120, 1
    %s122 = scalar_select %p119, %s120, %s121
    %p125 = pneg %p119
    %p126 = scmp.eq.s32.totalorder %s11, 1
    %p127 = por %p125, %p126
    %p128 = scmp.ne.s32.totalorder %s120, %s123
    %p129 = scmp.eq.s32.totalorder %s11, 0
    %p130 = por %p128, %p129
    %p131 = scmp.ne.s32.totalorder %s120, %s123
    %p132 = scmp.eq.s32.totalorder %s16, 1
    %p133 = por %p131, %p132
    %p134 = scmp.ne.s32.totalorder %s123, %s124
    %p135 = scmp.eq.s32.totalorder %s16, 0
    %p136 = por %p134, %p135
    %p137 = scmp.ne.s32.totalorder %s123, %s124
    %p138 = scmp.eq.s32.totalorder %s17, 1
    %p139 = por %p137, %p138
    %p141 = scmp.ne.s32.totalorder %s124, %s140
    %p142 = scmp.eq.s32.totalorder %s17, 0
    %p143 = por %p141, %p142
    %p144 = scmp.le.s32.totalorder 1, %s11
    %p145 = scmp.lt.s32.totalorder %s11, 3
    %p146 = pnand %p144, %p145
    %p147 = pneg %p146
    // Predicated region
    $region9: #{basic_block_forward.4} parent=5 // pred_check
      _
    $region10: #{basic_block_forward.4} parent=5 // pred_check_branch
      %149 = sbr.rel (%p146) target = $region12
    $region11: #{basic_block_forward.4} parent=5 // pred_region
      %s150 = ssub.s32 %s11, 1
      // Predicated region
      $region13: #{basic_block_forward.4} parent=11 // pred_check
        %p151 = pneg %p58
      $region14: #{basic_block_forward.4} parent=11 // pred_check_branch
        %153 = sbr.rel (%p151) target = $region16
      $region15: #{basic_block_forward.4} parent=11 // pred_region
        _
      $region16: #{basic_block_forward.4} parent=11 // pred_fallthru
        _
    $region12: #{basic_block_forward.4} parent=5 // pred_fallthru
      _
    %p154 = scmp.lt.s32.totalorder %s11, 2
    // Predicated region
    $region17: #{basic_block_forward.4} parent=5 // pred_check
      %p155 = pneg %p154
    $region18: #{basic_block_forward.4} parent=5 // pred_check_branch
      %157 = sbr.rel (%p155) target = $region20
    $region19: #{basic_block_forward.4} parent=5 // pred_region
      // Predicated region
      $region21: #{basic_block_forward.4} parent=19 // pred_check
        %p158 = pneg %p31
      $region22: #{basic_block_forward.4} parent=19 // pred_check_branch
        %160 = sbr.rel (%p158) target = $region24
      $region23: #{basic_block_forward.4} parent=19 // pred_region
        %s161 = smul.u32 8, %s11
        %p162 = scmp.lt.s32.totalorder %s161, 15
        %s163 = scalar_select %p162, %s161, 15
        %s164 = smul.addr %s163, 4
        %s165 = scalar_lea.vmem %s0, %s164
        %s166 = smul.u32 8, %s11
      $region24: #{basic_block_forward.4} parent=19 // pred_fallthru
        _
    $region20: #{basic_block_forward.4} parent=5 // pred_fallthru
      _
    %p167 = scmp.le.s32.totalorder 1, %s11
    %p168 = scmp.lt.s32.totalorder %s11, 3
    %p169 = pnand %p167, %p168
    %p170 = pneg %p169
    // Predicated region
    $region25: #{basic_block_forward.4} parent=5 // pred_check
      _
    $region26: #{basic_block_forward.4} parent=5 // pred_check_branch
      %172 = sbr.rel (%p169) target = $region28
    $region27: #{basic_block_forward.4} parent=5 // pred_region
      %s173 = ssub.s32 %s11, 1
      %s174 = smul.u32 8, %s16
      %p175 = scmp.lt.s32.totalorder %s174, 15
      %s176 = scalar_select %p175, %s174, 15
      %s177 = smul.addr %s176, 4
      %s178 = scalar_lea.vmem %s0, %s177
      %p179 = pneg %p37
      %p180 = pneg %p34
      %p181 = pneg %p58
      %p182 = pneg %p55
      %p183 = pneg %p84
      %p184 = pneg %p81
      %s185 = smul.u32 8, %s16
      %p186 = scmp.lt.s32.totalorder %s185, 15
      %s187 = scalar_select %p186, %s185, 15
      %s188 = smul.addr %s187, 4
      %s189 = scalar_lea.vmem %s2, %s188
      %p190 = pneg %p110
      %p191 = pneg %p107
      %p192 = scmp.lt.s32.totalorder %s16, 1
      %s193 = scalar_select %p192, %s16, 1
      %s194 = smul.addr %s193, 8
      %s195 = scalar_lea.vmem %s3, %s194
      %p196 = pneg %p136
      %p197 = pneg %p133
      %p198 = scmp.lt.s32.totalorder %s16, 1
      %s199 = scalar_select %p198, %s16, 1
      %s200 = smul.addr %s199, 8
      %s201 = scalar_lea.vmem %s4, %s200
      %s202 = smul.u32 8, %s16
      %p203 = scmp.lt.s32.totalorder %s202, 15
      %s204 = scalar_select %p203, %s202, 15
      %s205 = smul.addr %s204, 4
      %s206 = scalar_lea.vmem %s0, %s205
      %s207 = smul.u32 8, %s16
      %s208 = smul.u32 8, %s16
      %p209 = scmp.lt.s32.totalorder %s208, 15
      %s210 = scalar_select %p209, %s208, 15
      %s211 = smul.addr %s210, 4
      %s212 = scalar_lea.vmem %s2, %s211
      %s213 = smul.u32 8, %s16
      %p214 = scmp.lt.s32.totalorder %s16, 1
      %s215 = scalar_select %p214, %s16, 1
      %s216 = smul.addr %s215, 8
      %s217 = scalar_lea.vmem %s3, %s216
      %p218 = scmp.lt.s32.totalorder %s16, 1
      %s219 = scalar_select %p218, %s16, 1
      %s220 = smul.addr %s219, 8
      %s221 = scalar_lea.vmem %s4, %s220
      %v223 = vld [vmem:[%s206] sm:$0xf]
      %v224 = vld [vmem:[%s206 + $0x4] sm:$0xf]
      %v225 = vld [vmem:[%s206 + $0x8] sm:$0xf]
      %v226 = vld [vmem:[%s206 + $0xc] sm:$0xf]
      %v227 = vld [vmem:[%s206 + $0x10] sm:$0xf]
      %v228 = vld [vmem:[%s206 + $0x14] sm:$0xf]
      %v229 = vld [vmem:[%s206 + $0x18] sm:$0xf]
      %v230 = vld [vmem:[%s206 + $0x1c] sm:$0xf]
      %v231 = vld [vmem:[%s1] sm:$0xf]
      %v232 = vld [vmem:[%s1 + $0x4] sm:$0xf]
      %v233 = vld [vmem:[%s1 + $0x8] sm:$0xf]
      %v234 = vld [vmem:[%s1 + $0xc] sm:$0xf]
      %v235 = vld [vmem:[%s1 + $0x10] sm:$0x3]
      %v244 = vunpack.c.l.b16 %v223
      %v245 = vunpack.c.l.b16 %v224
      %v246 = vunpack.c.l.b16 %v225
      %v247 = vunpack.c.l.b16 %v226
      %v248 = vunpack.c.l.b16 %v227
      %v249 = vunpack.c.l.b16 %v228
      %v250 = vunpack.c.l.b16 %v229
      %v251 = vunpack.c.l.b16 %v230
      %v252 = vpack.c.b16 %v245, %v244
      %v253 = vpack.c.b16 %v247, %v246
      %v254 = vpack.c.b16 %v249, %v248
      %v255 = vpack.c.b16 %v251, %v250
      %v261 = vunpack.c.l.b16 %v231
      %v262 = vunpack.c.l.b16 %v232
      %v263 = vunpack.c.l.b16 %v233
      %v264 = vunpack.c.l.b16 %v234
      %v265 = vunpack.c.l.b16 %v235
      %v266 = vpack.c.b16 %v262, %v261
      %v267 = vpack.c.b16 %v264, %v263
      %v268 = vpack.c.b16 %v265, %v265
      %vm271 = vcmask 293888
      %v273 = vsel %vm271, %v252, 0
      %v276 = vsel %vm271, %v253, 0
      %v279 = vsel %vm271, %v254, 0
      %v282 = vsel %vm271, %v255, 0
      %vm284 = vcmask 1041408
      %v286 = vsel %vm284, %v268, 0
      %288 = vmatprep.subr.bf16.mxu0 0
      %289 = vmatpush1.bf16.msra.mxu0 0
      %290 = vmatprep.subr.bf16.mxu0 0
      %291 = vmatpush1.bf16.msra.mxu0 0
      %292 = vmatprep.subr.bf16.mxu0 0
      %293 = vmatpush1.bf16.msra.mxu0 0
      %294 = vmatprep.subr.bf16.mxu0 0
      %295 = vmatpush1.bf16.msra.mxu0 0
      %296 = vmatprep.subr.bf16.mxu0 0
      %297 = vmatpush1.bf16.msra.mxu0 0
      %298 = vmatprep.subr.bf16.mxu0 0
      %299 = vmatpush1.bf16.msra.mxu0 %v286
      %300 = vmatprep.subr.bf16.mxu0 0
      %301 = vmatpush1.bf16.msra.mxu0 %v267
      %302 = vmatprep.subr.bf16.mxu0 0
      %303 = vmatpush1.bf16.msra.mxu0 %v266
      %304 = vmatprep.subr.bf16.mxu0 0
      %305 = vmatpush2.bf16.msra.mxu0 0
      %306 = vmatprep.subr.bf16.mxu0 0
      %307 = vmatpush2.bf16.msra.mxu0 0
      %308 = vmatprep.subr.bf16.mxu0 0
      %309 = vmatpush2.bf16.msra.mxu0 0
      %310 = vmatprep.subr.bf16.mxu0 0
      %311 = vmatpush2.bf16.msra.mxu0 0
      %312 = vmatprep.subr.bf16.mxu0 0
      %313 = vmatpush2.bf16.msra.mxu0 0
      %314 = vmatprep.subr.bf16.mxu0 0
      %315 = vmatpush2.bf16.msra.mxu0 0
      %316 = vmatprep.subr.bf16.mxu0 0
      %317 = vmatpush2.bf16.msra.mxu0 0
      %318 = vmatprep.subr.bf16.mxu0 0
      %319 = vmatpush2.bf16.msra.mxu0 0
      %320 = vmatprep.mubr.bf16.mxu0 0
      %321 = vmatmul.mubr.bf16.gmra.mxu0 %v273
      %v322 = vpop.f32.mrf.mxu0
      %v323 = vadd.f32 0.0, %v322
      %v324 = vpop.f32.mrf.mxu0
      %v325 = vpop.f32.mrf.mxu0
      %v326 = vadd.f32 0.0, %v325
      %v327 = vpop.f32.mrf.mxu0
      %328 = vmatprep.mubr.bf16.mxu0 0
      %329 = vmatmul.mubr.bf16.gmra.mxu0 %v276
      %v330 = vpop.f32.mrf.mxu0
      %v331 = vadd.f32 0.0, %v330
      %v332 = vpop.f32.mrf.mxu0
      %v333 = vpop.f32.mrf.mxu0
      %v334 = vadd.f32 0.0, %v333
      %v335 = vpop.f32.mrf.mxu0
      %336 = vmatprep.mubr.bf16.mxu0 0
      %337 = vmatmul.mubr.bf16.gmra.mxu0 %v279
      %v338 = vpop.f32.mrf.mxu0
      %v339 = vadd.f32 0.0, %v338
      %v340 = vpop.f32.mrf.mxu0
      %v341 = vpop.f32.mrf.mxu0
      %v342 = vadd.f32 0.0, %v341
      %v343 = vpop.f32.mrf.mxu0
      %344 = vmatprep.mubr.bf16.mxu0 0
      %345 = vmatmul.mubr.bf16.gmra.mxu0 %v282
      %v346 = vpop.f32.mrf.mxu0
      %v347 = vadd.f32 0.0, %v346
      %v348 = vpop.f32.mrf.mxu0
      %v349 = vpop.f32.mrf.mxu0
      %v350 = vadd.f32 0.0, %v349
      %v351 = vpop.f32.mrf.mxu0
      %352 = vdwg.mxu0
      %v353 = vpack.c.bf16 %v326, %v323
      %v354 = vpack.c.bf16 %v334, %v331
      %v355 = vpack.c.bf16 %v342, %v339
      %v356 = vpack.c.bf16 %v350, %v347
      %v361 = vunpack.c.l.b16 %v353
      %v362 = vunpack.c.h.b16 %v353
      %v363 = vunpack.c.l.b16 %v354
      %v364 = vunpack.c.h.b16 %v354
      %v365 = vunpack.c.l.b16 %v355
      %v366 = vunpack.c.h.b16 %v355
      %v367 = vunpack.c.l.b16 %v356
      %v368 = vunpack.c.h.b16 %v356
      %v369 = vpack.c.b16 %v361, %v361
      %v370 = vpack.c.b16 %v362, %v362
      %v371 = vpack.c.b16 %v363, %v363
      %v372 = vpack.c.b16 %v364, %v364
      %v373 = vpack.c.b16 %v365, %v365
      %v374 = vpack.c.b16 %v366, %v366
      %v375 = vpack.c.b16 %v367, %v367
      %v376 = vpack.c.b16 %v368, %v368
      %385 = vst [vmem:[%s212] sm:$0xf] %v369
      %386 = vst [vmem:[%s212 + $0x4] sm:$0xf] %v370
      %387 = vst [vmem:[%s212 + $0x8] sm:$0xf] %v371
      %388 = vst [vmem:[%s212 + $0xc] sm:$0xf] %v372
      %389 = vst [vmem:[%s212 + $0x10] sm:$0xf] %v373
      %390 = vst [vmem:[%s212 + $0x14] sm:$0xf] %v374
      %391 = vst [vmem:[%s212 + $0x18] sm:$0xf] %v375
      %392 = vst [vmem:[%s212 + $0x1c] sm:$0xf] %v376
      %v393 = vadd.f32 %v323, %v326
      %v394 = vadd.f32 %v393, %v331
      %v395 = vadd.f32 %v394, %v334
      %v396 = vadd.f32 %v395, %v339
      %v397 = vadd.f32 %v396, %v342
      %v398 = vadd.f32 %v397, %v347
      %v399 = vadd.f32 %v398, %v350
      %v400 = vrot.slane %v399, 4
      %v401 = vadd.f32 %v399, %v400
      %v402 = vrot.slane %v401, 2
      %v403 = vadd.f32 %v401, %v402
      %v404 = vrot.slane %v403, 1
      %v405 = vadd.f32 %v403, %v404
      %v406 = vmul.f32 %v323, %v323
      %v407 = vmul.f32 %v326, %v326
      %v408 = vmul.f32 %v331, %v331
      %v409 = vmul.f32 %v334, %v334
      %v410 = vmul.f32 %v339, %v339
      %v411 = vmul.f32 %v342, %v342
      %v412 = vmul.f32 %v347, %v347
      %v413 = vmul.f32 %v350, %v350
      %v414 = vadd.f32 %v406, %v407
      %v415 = vadd.f32 %v414, %v408
      %v416 = vadd.f32 %v415, %v409
      %v417 = vadd.f32 %v416, %v410
      %v418 = vadd.f32 %v417, %v411
      %v419 = vadd.f32 %v418, %v412
      %v420 = vadd.f32 %v419, %v413
      %v421 = vrot.slane %v420, 4
      %v422 = vadd.f32 %v420, %v421
      %v423 = vrot.slane %v422, 2
      %v424 = vadd.f32 %v422, %v423
      %v425 = vrot.slane %v424, 1
      %v426 = vadd.f32 %v424, %v425
      %427 = vst [vmem:[%s217] sm:$0xff] %v405
      %428 = vst [vmem:[%s221] sm:$0xff] %v426
      %s429 = smul.u32 8, %s16
      %p430 = scmp.lt.s32.totalorder %s429, 15
      %s431 = scalar_select %p430, %s429, 15
      %s432 = smul.addr %s431, 4
      %s433 = scalar_lea.vmem %s2, %s432
      %p434 = scmp.lt.s32.totalorder %s16, 1
      %s435 = scalar_select %p434, %s16, 1
      %s436 = smul.addr %s435, 8
      %s437 = scalar_lea.vmem %s3, %s436
      %p438 = scmp.lt.s32.totalorder %s16, 1
      %s439 = scalar_select %p438, %s16, 1
      %s440 = smul.addr %s439, 8
      %s441 = scalar_lea.vmem %s4, %s440
      // Predicated region
      $region29: #{basic_block_forward.4} parent=27 // pred_check
        %p442 = pneg %p81
      $region30: #{basic_block_forward.4} parent=27 // pred_check_branch
        %444 = sbr.rel (%p442) target = $region32
      $region31: #{basic_block_forward.4} parent=27 // pred_region
        %s445 = smul.u32 8, %s16
      $region32: #{basic_block_forward.4} parent=27 // pred_fallthru
        _
      // Predicated region
      $region33: #{basic_block_forward.4} parent=27 // pred_check
        %p446 = pneg %p107
      $region34: #{basic_block_forward.4} parent=27 // pred_check_branch
        %448 = sbr.rel (%p446) target = $region36
      $region35: #{basic_block_forward.4} parent=27 // pred_region
        _
      $region36: #{basic_block_forward.4} parent=27 // pred_fallthru
        _
      // Predicated region
      $region37: #{basic_block_forward.4} parent=27 // pred_check
        %p449 = pneg %p133
      $region38: #{basic_block_forward.4} parent=27 // pred_check_branch
        %451 = sbr.rel (%p449) target = $region40
      $region39: #{basic_block_forward.4} parent=27 // pred_region
        _
      $region40: #{basic_block_forward.4} parent=27 // pred_fallthru
        _
    $region28: #{basic_block_forward.4} parent=5 // pred_fallthru
      _
    %p452 = scmp.le.s32.totalorder 2, %s11
    // Predicated region
    $region41: #{basic_block_forward.4} parent=5 // pred_check
      %p453 = pneg %p452
    $region42: #{basic_block_forward.4} parent=5 // pred_check_branch
      %455 = sbr.rel (%p453) target = $region44
    $region43: #{basic_block_forward.4} parent=5 // pred_region
      %s456 = ssub.s32 %s11, 2
      // Predicated region
      $region45: #{basic_block_forward.4} parent=43 // pred_check
        %p457 = pneg %p87
      $region46: #{basic_block_forward.4} parent=43 // pred_check_branch
        %459 = sbr.rel (%p457) target = $region48
      $region47: #{basic_block_forward.4} parent=43 // pred_region
        %s460 = smul.u32 8, %s17
        %p461 = scmp.lt.s32.totalorder %s460, 15
        %s462 = scalar_select %p461, %s460, 15
        %s463 = smul.addr %s462, 4
        %s464 = scalar_lea.vmem %s2, %s463
      $region48: #{basic_block_forward.4} parent=43 // pred_fallthru
        _
      // Predicated region
      $region49: #{basic_block_forward.4} parent=43 // pred_check
        %p465 = pneg %p113
      $region50: #{basic_block_forward.4} parent=43 // pred_check_branch
        %467 = sbr.rel (%p465) target = $region52
      $region51: #{basic_block_forward.4} parent=43 // pred_region
        %p468 = scmp.lt.s32.totalorder %s17, 1
        %s469 = scalar_select %p468, %s17, 1
        %s470 = smul.addr %s469, 8
        %s471 = scalar_lea.vmem %s3, %s470
      $region52: #{basic_block_forward.4} parent=43 // pred_fallthru
        _
      // Predicated region
      $region53: #{basic_block_forward.4} parent=43 // pred_check
        %p472 = pneg %p139
      $region54: #{basic_block_forward.4} parent=43 // pred_check_branch
        %474 = sbr.rel (%p472) target = $region56
      $region55: #{basic_block_forward.4} parent=43 // pred_region
        %p475 = scmp.lt.s32.totalorder %s17, 1
        %s476 = scalar_select %p475, %s17, 1
        %s477 = smul.addr %s476, 8
        %s478 = scalar_lea.vmem %s4, %s477
      $region56: #{basic_block_forward.4} parent=43 // pred_fallthru
        _
    $region44: #{basic_block_forward.4} parent=5 // pred_fallthru
      _
  $region6: #{basic_block_forward.4} parent=0 // loop_footer
    %s15 = sadd.s32 1, %s11
  $region7: #{basic_block_forward.4} parent=0 // loop_footer_branch
    %10 = sbr.rel target = $region3
  $region8: #{basic_block_forward.4} parent=0 // loop_exit
    _

// kernel: basic_block_forward.6
$region0: #{basic_block_forward.6}
  #allocation0 [shape = 'u32[]', space=smem, size = 0x4, offset = 0x4, fixed_abs, tag = 'smem constant byte address 0x4 - core index']
  #allocation1 [shape = 'u32[144,128]{1,0:T(1,128)}', space=vmem, size = 0x12000, scoped, tag = 'internal scratch']
  %s0 = inlined_call_operand.vmem [shape: bf16[128,4], index: 0, kind: input, shape index: {}]
  %s1 = inlined_call_operand.vmem [shape: bf16[4,128], index: 1, kind: input, shape index: {}]
  %s2 = inlined_call_operand.vmem [shape: bf16[128,128], index: 2, kind: output, shape index: {0}]
  %s3 = inlined_call_operand.vmem [shape: f32[16,128], index: 3, kind: output, shape index: {1}]
  %s4 = inlined_call_operand.vmem [shape: f32[16,128], index: 4, kind: output, shape index: {2}]
  %5 = xla_tuple %s2, %s3, %s4
  %s6 = sld [smem:[#allocation0]]
  $region57: #{basic_block_forward.6} parent=0
    _
  %s8 = ssub.s32 1, %s6
  %s9 = scalar_select 0, %s8, %s6
  loop: start=0, step=1, limit=4
  $region2: #{basic_block_forward.6} parent=0 // loop_pre_header
    _
  $region3: #{basic_block_forward.6} parent=0 // loop_header
    %s11 = sphi 0, %s15
    %p12 = scmp.ge.s32.totalorder %s11, 4
    %s21 = sphi 0, %s23
    %s24 = sphi 0, %s21
    %s25 = sphi 0, %s24
    %s41 = sphi 0, %s25
    %s45 = sphi 0, %s45
    %s47 = sphi 0, %s45
    %s48 = sphi 0, %s47
    %s62 = sphi 0, %s48
    %s68 = sphi 0, %s70
    %s71 = sphi 0, %s68
    %s72 = sphi 0, %s71
    %s88 = sphi 0, %s72
    %s94 = sphi 0, %s96
    %s97 = sphi 0, %s94
    %s98 = sphi 0, %s97
    %s114 = sphi 0, %s98
    %s120 = sphi 0, %s122
    %s123 = sphi 0, %s120
    %s124 = sphi 0, %s123
    %s140 = sphi 0, %s124
  $region4: #{basic_block_forward.6} parent=0 // loop_header_branch
    %14 = sbr.rel (%p12) target = $region8
  $region5: #{basic_block_forward.6} parent=0 // loop_body
    %s16 = ssub.s32 %s11, 1
    %s17 = ssub.s32 %s11, 2
    %s18 = sadd.s32 %s11, 1
    %s19 = ssub.s32 %s11, %s18
    %p20 = scmp.eq.s32.totalorder %s19, 0
    %s22 = sadd.s32 %s21, 1
    %s23 = scalar_select %p20, %s21, %s22
    %p26 = pneg %p20
    %p27 = scmp.eq.s32.totalorder %s11, 1
    %p28 = por %p26, %p27
    %p29 = scmp.ne.s32.totalorder %s21, %s24
    %p30 = scmp.eq.s32.totalorder %s11, 0
    %p31 = por %p29, %p30
    %p32 = scmp.ne.s32.totalorder %s21, %s24
    %p33 = scmp.eq.s32.totalorder %s16, 1
    %p34 = por %p32, %p33
    %p35 = scmp.ne.s32.totalorder %s24, %s25
    %p36 = scmp.eq.s32.totalorder %s16, 0
    %p37 = por %p35, %p36
    %p38 = scmp.ne.s32.totalorder %s24, %s25
    %p39 = scmp.eq.s32.totalorder %s17, 1
    %p40 = por %p38, %p39
    %p42 = scmp.ne.s32.totalorder %s25, %s41
    %p43 = scmp.eq.s32.totalorder %s17, 0
    %p44 = por %p42, %p43
    %s46 = sadd.s32 %s45, 1
    %p49 = scmp.eq.s32.totalorder %s11, 1
    %p50 = scmp.ne.s32.totalorder %s45, %s47
    %p51 = scmp.eq.s32.totalorder %s11, 0
    %p52 = por %p50, %p51
    %p53 = scmp.ne.s32.totalorder %s45, %s47
    %p54 = scmp.eq.s32.totalorder %s16, 1
    %p55 = por %p53, %p54
    %p56 = scmp.ne.s32.totalorder %s47, %s48
    %p57 = scmp.eq.s32.totalorder %s16, 0
    %p58 = por %p56, %p57
    %p59 = scmp.ne.s32.totalorder %s47, %s48
    %p60 = scmp.eq.s32.totalorder %s17, 1
    %p61 = por %p59, %p60
    %p63 = scmp.ne.s32.totalorder %s48, %s62
    %p64 = scmp.eq.s32.totalorder %s17, 0
    %p65 = por %p63, %p64
    %s66 = ssub.s32 %s11, %s18
    %p67 = scmp.eq.s32.totalorder %s66, 0
    %s69 = sadd.s32 %s68, 1
    %s70 = scalar_select %p67, %s68, %s69
    %p73 = pneg %p67
    %p74 = scmp.eq.s32.totalorder %s11, 1
    %p75 = por %p73, %p74
    %p76 = scmp.ne.s32.totalorder %s68, %s71
    %p77 = scmp.eq.s32.totalorder %s11, 0
    %p78 = por %p76, %p77
    %p79 = scmp.ne.s32.totalorder %s68, %s71
    %p80 = scmp.eq.s32.totalorder %s16, 1
    %p81 = por %p79, %p80
    %p82 = scmp.ne.s32.totalorder %s71, %s72
    %p83 = scmp.eq.s32.totalorder %s16, 0
    %p84 = por %p82, %p83
    %p85 = scmp.ne.s32.totalorder %s71, %s72
    %p86 = scmp.eq.s32.totalorder %s17, 1
    %p87 = por %p85, %p86
    %p89 = scmp.ne.s32.totalorder %s72, %s88
    %p90 = scmp.eq.s32.totalorder %s17, 0
    %p91 = por %p89, %p90
    %s92 = ssub.s32 %s11, %s18
    %p93 = scmp.eq.s32.totalorder %s92, 0
    %s95 = sadd.s32 %s94, 1
    %s96 = scalar_select %p93, %s94, %s95
    %p99 = pneg %p93
    %p100 = scmp.eq.s32.totalorder %s11, 1
    %p101 = por %p99, %p100
    %p102 = scmp.ne.s32.totalorder %s94, %s97
    %p103 = scmp.eq.s32.totalorder %s11, 0
    %p104 = por %p102, %p103
    %p105 = scmp.ne.s32.totalorder %s94, %s97
    %p106 = scmp.eq.s32.totalorder %s16, 1
    %p107 = por %p105, %p106
    %p108 = scmp.ne.s32.totalorder %s97, %s98
    %p109 = scmp.eq.s32.totalorder %s16, 0
    %p110 = por %p108, %p109
    %p111 = scmp.ne.s32.totalorder %s97, %s98
    %p112 = scmp.eq.s32.totalorder %s17, 1
    %p113 = por %p111, %p112
    %p115 = scmp.ne.s32.totalorder %s98, %s114
    %p116 = scmp.eq.s32.totalorder %s17, 0
    %p117 = por %p115, %p116
    %s118 = ssub.s32 %s11, %s18
    %p119 = scmp.eq.s32.totalorder %s118, 0
    %s121 = sadd.s32 %s120, 1
    %s122 = scalar_select %p119, %s120, %s121
    %p125 = pneg %p119
    %p126 = scmp.eq.s32.totalorder %s11, 1
    %p127 = por %p125, %p126
    %p128 = scmp.ne.s32.totalorder %s120, %s123
    %p129 = scmp.eq.s32.totalorder %s11, 0
    %p130 = por %p128, %p129
    %p131 = scmp.ne.s32.totalorder %s120, %s123
    %p132 = scmp.eq.s32.totalorder %s16, 1
    %p133 = por %p131, %p132
    %p134 = scmp.ne.s32.totalorder %s123, %s124
    %p135 = scmp.eq.s32.totalorder %s16, 0
    %p136 = por %p134, %p135
    %p137 = scmp.ne.s32.totalorder %s123, %s124
    %p138 = scmp.eq.s32.totalorder %s17, 1
    %p139 = por %p137, %p138
    %p141 = scmp.ne.s32.totalorder %s124, %s140
    %p142 = scmp.eq.s32.totalorder %s17, 0
    %p143 = por %p141, %p142
    %p144 = scmp.le.s32.totalorder 1, %s11
    %p145 = scmp.lt.s32.totalorder %s11, 3
    %p146 = pnand %p144, %p145
    %p147 = pneg %p146
    // Predicated region
    $region9: #{basic_block_forward.6} parent=5 // pred_check
      _
    $region10: #{basic_block_forward.6} parent=5 // pred_check_branch
      %149 = sbr.rel (%p146) target = $region12
    $region11: #{basic_block_forward.6} parent=5 // pred_region
      %s150 = ssub.s32 %s11, 1
      // Predicated region
      $region13: #{basic_block_forward.6} parent=11 // pred_check
        %p151 = pneg %p58
      $region14: #{basic_block_forward.6} parent=11 // pred_check_branch
        %153 = sbr.rel (%p151) target = $region16
      $region15: #{basic_block_forward.6} parent=11 // pred_region
        _
      $region16: #{basic_block_forward.6} parent=11 // pred_fallthru
        _
    $region12: #{basic_block_forward.6} parent=5 // pred_fallthru
      _
    %p154 = scmp.lt.s32.totalorder %s11, 2
    // Predicated region
    $region17: #{basic_block_forward.6} parent=5 // pred_check
      %p155 = pneg %p154
    $region18: #{basic_block_forward.6} parent=5 // pred_check_branch
      %157 = sbr.rel (%p155) target = $region20
    $region19: #{basic_block_forward.6} parent=5 // pred_region
      // Predicated region
      $region21: #{basic_block_forward.6} parent=19 // pred_check
        %p158 = pneg %p31
      $region22: #{basic_block_forward.6} parent=19 // pred_check_branch
        %160 = sbr.rel (%p158) target = $region24
      $region23: #{basic_block_forward.6} parent=19 // pred_region
        %s161 = smul.u32 8, %s11
        %p162 = scmp.lt.s32.totalorder %s161, 15
        %s163 = scalar_select %p162, %s161, 15
        %s164 = smul.addr %s163, 4
        %s165 = scalar_lea.vmem %s0, %s164
        %s166 = smul.u32 8, %s11
      $region24: #{basic_block_forward.6} parent=19 // pred_fallthru
        _
    $region20: #{basic_block_forward.6} parent=5 // pred_fallthru
      _
    %p167 = scmp.le.s32.totalorder 1, %s11
    %p168 = scmp.lt.s32.totalorder %s11, 3
    %p169 = pnand %p167, %p168
    %p170 = pneg %p169
    // Predicated region
    $region25: #{basic_block_forward.6} parent=5 // pred_check
      _
    $region26: #{basic_block_forward.6} parent=5 // pred_check_branch
      %172 = sbr.rel (%p169) target = $region28
    $region27: #{basic_block_forward.6} parent=5 // pred_region
      %s173 = ssub.s32 %s11, 1
      %s174 = smul.u32 8, %s16
      %p175 = scmp.lt.s32.totalorder %s174, 15
      %s176 = scalar_select %p175, %s174, 15
      %s177 = smul.addr %s176, 4
      %s178 = scalar_lea.vmem %s0, %s177
      %p179 = pneg %p37
      %p180 = pneg %p34
      %p181 = pneg %p58
      %p182 = pneg %p55
      %p183 = pneg %p84
      %p184 = pneg %p81
      %s185 = smul.u32 8, %s16
      %p186 = scmp.lt.s32.totalorder %s185, 15
      %s187 = scalar_select %p186, %s185, 15
      %s188 = smul.addr %s187, 4
      %s189 = scalar_lea.vmem %s2, %s188
      %p190 = pneg %p110
      %p191 = pneg %p107
      %p192 = scmp.lt.s32.totalorder %s16, 1
      %s193 = scalar_select %p192, %s16, 1
      %s194 = smul.addr %s193, 8
      %s195 = scalar_lea.vmem %s3, %s194
      %p196 = pneg %p136
      %p197 = pneg %p133
      %p198 = scmp.lt.s32.totalorder %s16, 1
      %s199 = scalar_select %p198, %s16, 1
      %s200 = smul.addr %s199, 8
      %s201 = scalar_lea.vmem %s4, %s200
      %s202 = smul.u32 8, %s16
      %p203 = scmp.lt.s32.totalorder %s202, 15
      %s204 = scalar_select %p203, %s202, 15
      %s205 = smul.addr %s204, 4
      %s206 = scalar_lea.vmem %s0, %s205
      %s207 = smul.u32 8, %s16
      %s208 = smul.u32 8, %s16
      %p209 = scmp.lt.s32.totalorder %s208, 15
      %s210 = scalar_select %p209, %s208, 15
      %s211 = smul.addr %s210, 4
      %s212 = scalar_lea.vmem %s2, %s211
      %s213 = smul.u32 8, %s16
      %p214 = scmp.lt.s32.totalorder %s16, 1
      %s215 = scalar_select %p214, %s16, 1
      %s216 = smul.addr %s215, 8
      %s217 = scalar_lea.vmem %s3, %s216
      %p218 = scmp.lt.s32.totalorder %s16, 1
      %s219 = scalar_select %p218, %s16, 1
      %s220 = smul.addr %s219, 8
      %s221 = scalar_lea.vmem %s4, %s220
      %v223 = vld [vmem:[%s206] sm:$0xf]
      %v224 = vld [vmem:[%s206 + $0x4] sm:$0xf]
      %v225 = vld [vmem:[%s206 + $0x8] sm:$0xf]
      %v226 = vld [vmem:[%s206 + $0xc] sm:$0xf]
      %v227 = vld [vmem:[%s206 + $0x10] sm:$0xf]
      %v228 = vld [vmem:[%s206 + $0x14] sm:$0xf]
      %v229 = vld [vmem:[%s206 + $0x18] sm:$0xf]
      %v230 = vld [vmem:[%s206 + $0x1c] sm:$0xf]
      %v231 = vld [vmem:[%s1] sm:$0x3]
      %v240 = vunpack.c.l.b16 %v223
      %v241 = vunpack.c.l.b16 %v224
      %v242 = vunpack.c.l.b16 %v225
      %v243 = vunpack.c.l.b16 %v226
      %v244 = vunpack.c.l.b16 %v227
      %v245 = vunpack.c.l.b16 %v228
      %v246 = vunpack.c.l.b16 %v229
      %v247 = vunpack.c.l.b16 %v230
      %v248 = vpack.c.b16 %v241, %v240
      %v249 = vpack.c.b16 %v243, %v242
      %v250 = vpack.c.b16 %v245, %v244
      %v251 = vpack.c.b16 %v247, %v246
      %vm252 = vcmask 31744
      %v254 = vsel %vm252, %v248, 0
      %v257 = vsel %vm252, %v249, 0
      %v260 = vsel %vm252, %v250, 0
      %v263 = vsel %vm252, %v251, 0
      %vm265 = vcmask 1041408
      %v267 = vsel %vm265, %v231, 0
      %269 = vmatprep.subr.bf16.mxu0 0
      %270 = vmatpush1.bf16.msra.mxu0 0
      %271 = vmatprep.subr.bf16.mxu0 0
      %272 = vmatpush1.bf16.msra.mxu0 0
      %273 = vmatprep.subr.bf16.mxu0 0
      %274 = vmatpush1.bf16.msra.mxu0 0
      %275 = vmatprep.subr.bf16.mxu0 0
      %276 = vmatpush1.bf16.msra.mxu0 0
      %277 = vmatprep.subr.bf16.mxu0 0
      %278 = vmatpush1.bf16.msra.mxu0 0
      %279 = vmatprep.subr.bf16.mxu0 0
      %280 = vmatpush1.bf16.msra.mxu0 0
      %281 = vmatprep.subr.bf16.mxu0 0
      %282 = vmatpush1.bf16.msra.mxu0 0
      %283 = vmatprep.subr.bf16.mxu0 0
      %284 = vmatpush1.bf16.msra.mxu0 %v267
      %285 = vmatprep.subr.bf16.mxu0 0
      %286 = vmatpush2.bf16.msra.mxu0 0
      %287 = vmatprep.subr.bf16.mxu0 0
      %288 = vmatpush2.bf16.msra.mxu0 0
      %289 = vmatprep.subr.bf16.mxu0 0
      %290 = vmatpush2.bf16.msra.mxu0 0
      %291 = vmatprep.subr.bf16.mxu0 0
      %292 = vmatpush2.bf16.msra.mxu0 0
      %293 = vmatprep.subr.bf16.mxu0 0
      %294 = vmatpush2.bf16.msra.mxu0 0
      %295 = vmatprep.subr.bf16.mxu0 0
      %296 = vmatpush2.bf16.msra.mxu0 0
      %297 = vmatprep.subr.bf16.mxu0 0
      %298 = vmatpush2.bf16.msra.mxu0 0
      %299 = vmatprep.subr.bf16.mxu0 0
      %300 = vmatpush2.bf16.msra.mxu0 0
      %301 = vmatprep.mubr.bf16.mxu0 0
      %302 = vmatmul.mubr.bf16.gmra.mxu0 %v254
      %v303 = vpop.f32.mrf.mxu0
      %v304 = vadd.f32 0.0, %v303
      %v305 = vpop.f32.mrf.mxu0
      %v306 = vpop.f32.mrf.mxu0
      %v307 = vadd.f32 0.0, %v306
      %v308 = vpop.f32.mrf.mxu0
      %309 = vmatprep.mubr.bf16.mxu0 0
      %310 = vmatmul.mubr.bf16.gmra.mxu0 %v257
      %v311 = vpop.f32.mrf.mxu0
      %v312 = vadd.f32 0.0, %v311
      %v313 = vpop.f32.mrf.mxu0
      %v314 = vpop.f32.mrf.mxu0
      %v315 = vadd.f32 0.0, %v314
      %v316 = vpop.f32.mrf.mxu0
      %317 = vmatprep.mubr.bf16.mxu0 0
      %318 = vmatmul.mubr.bf16.gmra.mxu0 %v260
      %v319 = vpop.f32.mrf.mxu0
      %v320 = vadd.f32 0.0, %v319
      %v321 = vpop.f32.mrf.mxu0
      %v322 = vpop.f32.mrf.mxu0
      %v323 = vadd.f32 0.0, %v322
      %v324 = vpop.f32.mrf.mxu0
      %325 = vmatprep.mubr.bf16.mxu0 0
      %326 = vmatmul.mubr.bf16.gmra.mxu0 %v263
      %v327 = vpop.f32.mrf.mxu0
      %v328 = vadd.f32 0.0, %v327
      %v329 = vpop.f32.mrf.mxu0
      %v330 = vpop.f32.mrf.mxu0
      %v331 = vadd.f32 0.0, %v330
      %v332 = vpop.f32.mrf.mxu0
      %333 = vdwg.mxu0
      %v334 = vpack.c.bf16 %v307, %v304
      %v335 = vpack.c.bf16 %v315, %v312
      %v336 = vpack.c.bf16 %v323, %v320
      %v337 = vpack.c.bf16 %v331, %v328
      %v342 = vunpack.c.l.b16 %v334
      %v343 = vunpack.c.h.b16 %v334
      %v344 = vunpack.c.l.b16 %v335
      %v345 = vunpack.c.h.b16 %v335
      %v346 = vunpack.c.l.b16 %v336
      %v347 = vunpack.c.h.b16 %v336
      %v348 = vunpack.c.l.b16 %v337
      %v349 = vunpack.c.h.b16 %v337
      %v350 = vpack.c.b16 %v342, %v342
      %v351 = vpack.c.b16 %v343, %v343
      %v352 = vpack.c.b16 %v344, %v344
      %v353 = vpack.c.b16 %v345, %v345
      %v354 = vpack.c.b16 %v346, %v346
      %v355 = vpack.c.b16 %v347, %v347
      %v356 = vpack.c.b16 %v348, %v348
      %v357 = vpack.c.b16 %v349, %v349
      %366 = vst [vmem:[%s212] sm:$0xf] %v350
      %367 = vst [vmem:[%s212 + $0x4] sm:$0xf] %v351
      %368 = vst [vmem:[%s212 + $0x8] sm:$0xf] %v352
      %369 = vst [vmem:[%s212 + $0xc] sm:$0xf] %v353
      %370 = vst [vmem:[%s212 + $0x10] sm:$0xf] %v354
      %371 = vst [vmem:[%s212 + $0x14] sm:$0xf] %v355
      %372 = vst [vmem:[%s212 + $0x18] sm:$0xf] %v356
      %373 = vst [vmem:[%s212 + $0x1c] sm:$0xf] %v357
      %v374 = vadd.f32 %v304, %v307
      %v375 = vadd.f32 %v374, %v312
      %v376 = vadd.f32 %v375, %v315
      %v377 = vadd.f32 %v376, %v320
      %v378 = vadd.f32 %v377, %v323
      %v379 = vadd.f32 %v378, %v328
      %v380 = vadd.f32 %v379, %v331
      %v381 = vrot.slane %v380, 4
      %v382 = vadd.f32 %v380, %v381
      %v383 = vrot.slane %v382, 2
      %v384 = vadd.f32 %v382, %v383
      %v385 = vrot.slane %v384, 1
      %v386 = vadd.f32 %v384, %v385
      %v387 = vmul.f32 %v304, %v304
      %v388 = vmul.f32 %v307, %v307
      %v389 = vmul.f32 %v312, %v312
      %v390 = vmul.f32 %v315, %v315
      %v391 = vmul.f32 %v320, %v320
      %v392 = vmul.f32 %v323, %v323
      %v393 = vmul.f32 %v328, %v328
      %v394 = vmul.f32 %v331, %v331
      %v395 = vadd.f32 %v387, %v388
      %v396 = vadd.f32 %v395, %v389
      %v397 = vadd.f32 %v396, %v390
      %v398 = vadd.f32 %v397, %v391
      %v399 = vadd.f32 %v398, %v392
      %v400 = vadd.f32 %v399, %v393
      %v401 = vadd.f32 %v400, %v394
      %v402 = vrot.slane %v401, 4
      %v403 = vadd.f32 %v401, %v402
      %v404 = vrot.slane %v403, 2
      %v405 = vadd.f32 %v403, %v404
      %v406 = vrot.slane %v405, 1
      %v407 = vadd.f32 %v405, %v406
      %408 = vst [vmem:[%s217] sm:$0xff] %v386
      %409 = vst [vmem:[%s221] sm:$0xff] %v407
      %s410 = smul.u32 8, %s16
      %p411 = scmp.lt.s32.totalorder %s410, 15
      %s412 = scalar_select %p411, %s410, 15
      %s413 = smul.addr %s412, 4
      %s414 = scalar_lea.vmem %s2, %s413
      %p415 = scmp.lt.s32.totalorder %s16, 1
      %s416 = scalar_select %p415, %s16, 1
      %s417 = smul.addr %s416, 8
      %s418 = scalar_lea.vmem %s3, %s417
      %p419 = scmp.lt.s32.totalorder %s16, 1
      %s420 = scalar_select %p419, %s16, 1
      %s421 = smul.addr %s420, 8
      %s422 = scalar_lea.vmem %s4, %s421
      // Predicated region
      $region29: #{basic_block_forward.6} parent=27 // pred_check
        %p423 = pneg %p81
      $region30: #{basic_block_forward.6} parent=27 // pred_check_branch
        %425 = sbr.rel (%p423) target = $region32
      $region31: #{basic_block_forward.6} parent=27 // pred_region
        %s426 = smul.u32 8, %s16
      $region32: #{basic_block_forward.6} parent=27 // pred_fallthru
        _
      // Predicated region
      $region33: #{basic_block_forward.6} parent=27 // pred_check
        %p427 = pneg %p107
      $region34: #{basic_block_forward.6} parent=27 // pred_check_branch
        %429 = sbr.rel (%p427) target = $region36
      $region35: #{basic_block_forward.6} parent=27 // pred_region
        _
      $region36: #{basic_block_forward.6} parent=27 // pred_fallthru
        _
      // Predicated region
      $region37: #{basic_block_forward.6} parent=27 // pred_check
        %p430 = pneg %p133
      $region38: #{basic_block_forward.6} parent=27 // pred_check_branch
        %432 = sbr.rel (%p430) target = $region40
      $region39: #{basic_block_forward.6} parent=27 // pred_region
        _
      $region40: #{basic_block_forward.6} parent=27 // pred_fallthru
        _
    $region28: #{basic_block_forward.6} parent=5 // pred_fallthru
      _
    %p433 = scmp.le.s32.totalorder 2, %s11
    // Predicated region
    $region41: #{basic_block_forward.6} parent=5 // pred_check
      %p434 = pneg %p433
    $region42: #{basic_block_forward.6} parent=5 // pred_check_branch
      %436 = sbr.rel (%p434) target = $region44
    $region43: #{basic_block_forward.6} parent=5 // pred_region
      %s437 = ssub.s32 %s11, 2
      // Predicated region
      $region45: #{basic_block_forward.6} parent=43 // pred_check
        %p438 = pneg %p87
      $region46: #{basic_block_forward.6} parent=43 // pred_check_branch
        %440 = sbr.rel (%p438) target = $region48
      $region47: #{basic_block_forward.6} parent=43 // pred_region
        %s441 = smul.u32 8, %s17
        %p442 = scmp.lt.s32.totalorder %s441, 15
        %s443 = scalar_select %p442, %s441, 15
        %s444 = smul.addr %s443, 4
        %s445 = scalar_lea.vmem %s2, %s444
      $region48: #{basic_block_forward.6} parent=43 // pred_fallthru
        _
      // Predicated region
      $region49: #{basic_block_forward.6} parent=43 // pred_check
        %p446 = pneg %p113
      $region50: #{basic_block_forward.6} parent=43 // pred_check_branch
        %448 = sbr.rel (%p446) target = $region52
      $region51: #{basic_block_forward.6} parent=43 // pred_region
        %p449 = scmp.lt.s32.totalorder %s17, 1
        %s450 = scalar_select %p449, %s17, 1
        %s451 = smul.addr %s450, 8
        %s452 = scalar_lea.vmem %s3, %s451
      $region52: #{basic_block_forward.6} parent=43 // pred_fallthru
        _
      // Predicated region
      $region53: #{basic_block_forward.6} parent=43 // pred_check
        %p453 = pneg %p139
      $region54: #{basic_block_forward.6} parent=43 // pred_check_branch
        %455 = sbr.rel (%p453) target = $region56
      $region55: #{basic_block_forward.6} parent=43 // pred_region
        %p456 = scmp.lt.s32.totalorder %s17, 1
        %s457 = scalar_select %p456, %s17, 1
        %s458 = smul.addr %s457, 8
        %s459 = scalar_lea.vmem %s4, %s458
      $region56: #{basic_block_forward.6} parent=43 // pred_fallthru
        _
    $region44: #{basic_block_forward.6} parent=5 // pred_fallthru
      _
  $region6: #{basic_block_forward.6} parent=0 // loop_footer
    %s15 = sadd.s32 1, %s11
  $region7: #{basic_block_forward.6} parent=0 // loop_footer_branch
    %10 = sbr.rel target = $region3
  $region8: #{basic_block_forward.6} parent=0 // loop_exit
    _

// kernel: basic_block_forward.7
$region0: #{basic_block_forward.7}
  #allocation0 [shape = 'u32[]', space=smem, size = 0x4, offset = 0x4, fixed_abs, tag = 'smem constant byte address 0x4 - core index']
  #allocation1 [shape = 'u32[144,128]{1,0:T(1,128)}', space=vmem, size = 0x12000, scoped, tag = 'internal scratch']
  %s0 = inlined_call_operand.vmem [shape: bf16[128,128], index: 0, kind: input, shape index: {}]
  %s1 = inlined_call_operand.vmem [shape: bf16[128,128], index: 1, kind: input, shape index: {}]
  %s2 = inlined_call_operand.vmem [shape: f32[1,128], index: 2, kind: input, shape index: {}]
  %s3 = inlined_call_operand.vmem [shape: f32[1,128], index: 3, kind: input, shape index: {}]
  %s4 = inlined_call_operand.vmem [shape: f32[1,128], index: 4, kind: input, shape index: {}]
  %s5 = inlined_call_operand.vmem [shape: f32[1,128], index: 5, kind: input, shape index: {}]
  %s6 = inlined_call_operand.vmem [shape: bf16[128,128], index: 6, kind: output, shape index: {}]
  %s7 = sld [smem:[#allocation0]]
  $region57: #{basic_block_forward.7} parent=0
    _
  %s9 = ssub.s32 1, %s7
  %s10 = scalar_select 0, %s9, %s7
  loop: start=0, step=1, limit=4
  $region2: #{basic_block_forward.7} parent=0 // loop_pre_header
    _
  $region3: #{basic_block_forward.7} parent=0 // loop_header
    %s12 = sphi 0, %s16
    %p13 = scmp.ge.s32.totalorder %s12, 4
    %s22 = sphi 0, %s24
    %s25 = sphi 0, %s22
    %s26 = sphi 0, %s25
    %s42 = sphi 0, %s26
    %s48 = sphi 0, %s50
    %s51 = sphi 0, %s48
    %s52 = sphi 0, %s51
    %s68 = sphi 0, %s52
    %s72 = sphi 0, %s72
    %s74 = sphi 0, %s72
    %s75 = sphi 0, %s74
    %s89 = sphi 0, %s75
    %s93 = sphi 0, %s93
    %s95 = sphi 0, %s93
    %s96 = sphi 0, %s95
    %s110 = sphi 0, %s96
    %s114 = sphi 0, %s114
    %s116 = sphi 0, %s114
    %s117 = sphi 0, %s116
    %s131 = sphi 0, %s117
    %s135 = sphi 0, %s135
    %s137 = sphi 0, %s135
    %s138 = sphi 0, %s137
    %s152 = sphi 0, %s138
    %s158 = sphi 0, %s160
    %s161 = sphi 0, %s158
    %s162 = sphi 0, %s161
    %s178 = sphi 0, %s162
  $region4: #{basic_block_forward.7} parent=0 // loop_header_branch
    %15 = sbr.rel (%p13) target = $region8
  $region5: #{basic_block_forward.7} parent=0 // loop_body
    %s17 = ssub.s32 %s12, 1
    %s18 = ssub.s32 %s12, 2
    %s19 = sadd.s32 %s12, 1
    %s20 = ssub.s32 %s12, %s19
    %p21 = scmp.eq.s32.totalorder %s20, 0
    %s23 = sadd.s32 %s22, 1
    %s24 = scalar_select %p21, %s22, %s23
    %p27 = pneg %p21
    %p28 = scmp.eq.s32.totalorder %s12, 1
    %p29 = por %p27, %p28
    %p30 = scmp.ne.s32.totalorder %s22, %s25
    %p31 = scmp.eq.s32.totalorder %s12, 0
    %p32 = por %p30, %p31
    %p33 = scmp.ne.s32.totalorder %s22, %s25
    %p34 = scmp.eq.s32.totalorder %s17, 1
    %p35 = por %p33, %p34
    %p36 = scmp.ne.s32.totalorder %s25, %s26
    %p37 = scmp.eq.s32.totalorder %s17, 0
    %p38 = por %p36, %p37
    %p39 = scmp.ne.s32.totalorder %s25, %s26
    %p40 = scmp.eq.s32.totalorder %s18, 1
    %p41 = por %p39, %p40
    %p43 = scmp.ne.s32.totalorder %s26, %s42
    %p44 = scmp.eq.s32.totalorder %s18, 0
    %p45 = por %p43, %p44
    %s46 = ssub.s32 %s12, %s19
    %p47 = scmp.eq.s32.totalorder %s46, 0
    %s49 = sadd.s32 %s48, 1
    %s50 = scalar_select %p47, %s48, %s49
    %p53 = pneg %p47
    %p54 = scmp.eq.s32.totalorder %s12, 1
    %p55 = por %p53, %p54
    %p56 = scmp.ne.s32.totalorder %s48, %s51
    %p57 = scmp.eq.s32.totalorder %s12, 0
    %p58 = por %p56, %p57
    %p59 = scmp.ne.s32.totalorder %s48, %s51
    %p60 = scmp.eq.s32.totalorder %s17, 1
    %p61 = por %p59, %p60
    %p62 = scmp.ne.s32.totalorder %s51, %s52
    %p63 = scmp.eq.s32.totalorder %s17, 0
    %p64 = por %p62, %p63
    %p65 = scmp.ne.s32.totalorder %s51, %s52
    %p66 = scmp.eq.s32.totalorder %s18, 1
    %p67 = por %p65, %p66
    %p69 = scmp.ne.s32.totalorder %s52, %s68
    %p70 = scmp.eq.s32.totalorder %s18, 0
    %p71 = por %p69, %p70
    %s73 = sadd.s32 %s72, 1
    %p76 = scmp.eq.s32.totalorder %s12, 1
    %p77 = scmp.ne.s32.totalorder %s72, %s74
    %p78 = scmp.eq.s32.totalorder %s12, 0
    %p79 = por %p77, %p78
    %p80 = scmp.ne.s32.totalorder %s72, %s74
    %p81 = scmp.eq.s32.totalorder %s17, 1
    %p82 = por %p80, %p81
    %p83 = scmp.ne.s32.totalorder %s74, %s75
    %p84 = scmp.eq.s32.totalorder %s17, 0
    %p85 = por %p83, %p84
    %p86 = scmp.ne.s32.totalorder %s74, %s75
    %p87 = scmp.eq.s32.totalorder %s18, 1
    %p88 = por %p86, %p87
    %p90 = scmp.ne.s32.totalorder %s75, %s89
    %p91 = scmp.eq.s32.totalorder %s18, 0
    %p92 = por %p90, %p91
    %s94 = sadd.s32 %s93, 1
    %p97 = scmp.eq.s32.totalorder %s12, 1
    %p98 = scmp.ne.s32.totalorder %s93, %s95
    %p99 = scmp.eq.s32.totalorder %s12, 0
    %p100 = por %p98, %p99
    %p101 = scmp.ne.s32.totalorder %s93, %s95
    %p102 = scmp.eq.s32.totalorder %s17, 1
    %p103 = por %p101, %p102
    %p104 = scmp.ne.s32.totalorder %s95, %s96
    %p105 = scmp.eq.s32.totalorder %s17, 0
    %p106 = por %p104, %p105
    %p107 = scmp.ne.s32.totalorder %s95, %s96
    %p108 = scmp.eq.s32.totalorder %s18, 1
    %p109 = por %p107, %p108
    %p111 = scmp.ne.s32.totalorder %s96, %s110
    %p112 = scmp.eq.s32.totalorder %s18, 0
    %p113 = por %p111, %p112
    %s115 = sadd.s32 %s114, 1
    %p118 = scmp.eq.s32.totalorder %s12, 1
    %p119 = scmp.ne.s32.totalorder %s114, %s116
    %p120 = scmp.eq.s32.totalorder %s12, 0
    %p121 = por %p119, %p120
    %p122 = scmp.ne.s32.totalorder %s114, %s116
    %p123 = scmp.eq.s32.totalorder %s17, 1
    %p124 = por %p122, %p123
    %p125 = scmp.ne.s32.totalorder %s116, %s117
    %p126 = scmp.eq.s32.totalorder %s17, 0
    %p127 = por %p125, %p126
    %p128 = scmp.ne.s32.totalorder %s116, %s117
    %p129 = scmp.eq.s32.totalorder %s18, 1
    %p130 = por %p128, %p129
    %p132 = scmp.ne.s32.totalorder %s117, %s131
    %p133 = scmp.eq.s32.totalorder %s18, 0
    %p134 = por %p132, %p133
    %s136 = sadd.s32 %s135, 1
    %p139 = scmp.eq.s32.totalorder %s12, 1
    %p140 = scmp.ne.s32.totalorder %s135, %s137
    %p141 = scmp.eq.s32.totalorder %s12, 0
    %p142 = por %p140, %p141
    %p143 = scmp.ne.s32.totalorder %s135, %s137
    %p144 = scmp.eq.s32.totalorder %s17, 1
    %p145 = por %p143, %p144
    %p146 = scmp.ne.s32.totalorder %s137, %s138
    %p147 = scmp.eq.s32.totalorder %s17, 0
    %p148 = por %p146, %p147
    %p149 = scmp.ne.s32.totalorder %s137, %s138
    %p150 = scmp.eq.s32.totalorder %s18, 1
    %p151 = por %p149, %p150
    %p153 = scmp.ne.s32.totalorder %s138, %s152
    %p154 = scmp.eq.s32.totalorder %s18, 0
    %p155 = por %p153, %p154
    %s156 = ssub.s32 %s12, %s19
    %p157 = scmp.eq.s32.totalorder %s156, 0
    %s159 = sadd.s32 %s158, 1
    %s160 = scalar_select %p157, %s158, %s159
    %p163 = pneg %p157
    %p164 = scmp.eq.s32.totalorder %s12, 1
    %p165 = por %p163, %p164
    %p166 = scmp.ne.s32.totalorder %s158, %s161
    %p167 = scmp.eq.s32.totalorder %s12, 0
    %p168 = por %p166, %p167
    %p169 = scmp.ne.s32.totalorder %s158, %s161
    %p170 = scmp.eq.s32.totalorder %s17, 1
    %p171 = por %p169, %p170
    %p172 = scmp.ne.s32.totalorder %s161, %s162
    %p173 = scmp.eq.s32.totalorder %s17, 0
    %p174 = por %p172, %p173
    %p175 = scmp.ne.s32.totalorder %s161, %s162
    %p176 = scmp.eq.s32.totalorder %s18, 1
    %p177 = por %p175, %p176
    %p179 = scmp.ne.s32.totalorder %s162, %s178
    %p180 = scmp.eq.s32.totalorder %s18, 0
    %p181 = por %p179, %p180
    %p182 = scmp.le.s32.totalorder 1, %s12
    %p183 = scmp.lt.s32.totalorder %s12, 3
    %p184 = pnand %p182, %p183
    %p185 = pneg %p184
    // Predicated region
    $region9: #{basic_block_forward.7} parent=5 // pred_check
      _
    $region10: #{basic_block_forward.7} parent=5 // pred_check_branch
      %187 = sbr.rel (%p184) target = $region12
    $region11: #{basic_block_forward.7} parent=5 // pred_region
      %s188 = ssub.s32 %s12, 1
      // Predicated region
      $region13: #{basic_block_forward.7} parent=11 // pred_check
        %p189 = pneg %p85
      $region14: #{basic_block_forward.7} parent=11 // pred_check_branch
        %191 = sbr.rel (%p189) target = $region16
      $region15: #{basic_block_forward.7} parent=11 // pred_region
        _
      $region16: #{basic_block_forward.7} parent=11 // pred_fallthru
        _
      // Predicated region
      $region17: #{basic_block_forward.7} parent=11 // pred_check
        %p192 = pneg %p106
      $region18: #{basic_block_forward.7} parent=11 // pred_check_branch
        %194 = sbr.rel (%p192) target = $region20
      $region19: #{basic_block_forward.7} parent=11 // pred_region
        _
      $region20: #{basic_block_forward.7} parent=11 // pred_fallthru
        _
      // Predicated region
      $region21: #{basic_block_forward.7} parent=11 // pred_check
        %p195 = pneg %p127
      $region22: #{basic_block_forward.7} parent=11 // pred_check_branch
        %197 = sbr.rel (%p195) target = $region24
      $region23: #{basic_block_forward.7} parent=11 // pred_region
        _
      $region24: #{basic_block_forward.7} parent=11 // pred_fallthru
        _
      // Predicated region
      $region25: #{basic_block_forward.7} parent=11 // pred_check
        %p198 = pneg %p148
      $region26: #{basic_block_forward.7} parent=11 // pred_check_branch
        %200 = sbr.rel (%p198) target = $region28
      $region27: #{basic_block_forward.7} parent=11 // pred_region
        _
      $region28: #{basic_block_forward.7} parent=11 // pred_fallthru
        _
    $region12: #{basic_block_forward.7} parent=5 // pred_fallthru
      _
    %p201 = scmp.lt.s32.totalorder %s12, 2
    // Predicated region
    $region29: #{basic_block_forward.7} parent=5 // pred_check
      %p202 = pneg %p201
    $region30: #{basic_block_forward.7} parent=5 // pred_check_branch
      %204 = sbr.rel (%p202) target = $region32
    $region31: #{basic_block_forward.7} parent=5 // pred_region
      // Predicated region
      $region33: #{basic_block_forward.7} parent=31 // pred_check
        %p205 = pneg %p32
      $region34: #{basic_block_forward.7} parent=31 // pred_check_branch
        %207 = sbr.rel (%p205) target = $region36
      $region35: #{basic_block_forward.7} parent=31 // pred_region
        %s208 = smul.u32 8, %s12
        %p209 = scmp.lt.s32.totalorder %s208, 15
        %s210 = scalar_select %p209, %s208, 15
        %s211 = smul.addr %s210, 4
        %s212 = scalar_lea.vmem %s0, %s211
        %s213 = smul.u32 8, %s12
      $region36: #{basic_block_forward.7} parent=31 // pred_fallthru
        _
      // Predicated region
      $region37: #{basic_block_forward.7} parent=31 // pred_check
        %p214 = pneg %p58
      $region38: #{basic_block_forward.7} parent=31 // pred_check_branch
        %216 = sbr.rel (%p214) target = $region40
      $region39: #{basic_block_forward.7} parent=31 // pred_region
        %s217 = smul.u32 8, %s12
        %p218 = scmp.lt.s32.totalorder %s217, 15
        %s219 = scalar_select %p218, %s217, 15
        %s220 = smul.addr %s219, 4
        %s221 = scalar_lea.vmem %s1, %s220
        %s222 = smul.u32 8, %s12
      $region40: #{basic_block_forward.7} parent=31 // pred_fallthru
        _
    $region32: #{basic_block_forward.7} parent=5 // pred_fallthru
      _
    %p223 = scmp.le.s32.totalorder 1, %s12
    %p224 = scmp.lt.s32.totalorder %s12, 3
    %p225 = pnand %p223, %p224
    %p226 = pneg %p225
    // Predicated region
    $region41: #{basic_block_forward.7} parent=5 // pred_check
      _
    $region42: #{basic_block_forward.7} parent=5 // pred_check_branch
      %228 = sbr.rel (%p225) target = $region44
    $region43: #{basic_block_forward.7} parent=5 // pred_region
      %s229 = ssub.s32 %s12, 1
      %s230 = smul.u32 8, %s17
      %p231 = scmp.lt.s32.totalorder %s230, 15
      %s232 = scalar_select %p231, %s230, 15
      %s233 = smul.addr %s232, 4
      %s234 = scalar_lea.vmem %s0, %s233
      %p235 = pneg %p38
      %p236 = pneg %p35
      %s237 = smul.u32 8, %s17
      %p238 = scmp.lt.s32.totalorder %s237, 15
      %s239 = scalar_select %p238, %s237, 15
      %s240 = smul.addr %s239, 4
      %s241 = scalar_lea.vmem %s1, %s240
      %p242 = pneg %p64
      %p243 = pneg %p61
      %p244 = pneg %p85
      %p245 = pneg %p82
      %p246 = pneg %p106
      %p247 = pneg %p103
      %p248 = pneg %p127
      %p249 = pneg %p124
      %p250 = pneg %p148
      %p251 = pneg %p145
      %p252 = pneg %p174
      %p253 = pneg %p171
      %s254 = smul.u32 8, %s17
      %p255 = scmp.lt.s32.totalorder %s254, 15
      %s256 = scalar_select %p255, %s254, 15
      %s257 = smul.addr %s256, 4
      %s258 = scalar_lea.vmem %s6, %s257
      %s259 = smul.u32 8, %s17
      %p260 = scmp.lt.s32.totalorder %s259, 15
      %s261 = scalar_select %p260, %s259, 15
      %s262 = smul.addr %s261, 4
      %s263 = scalar_lea.vmem %s0, %s262
      %s264 = smul.u32 8, %s17
      %s265 = smul.u32 8, %s17
      %p266 = scmp.lt.s32.totalorder %s265, 15
      %s267 = scalar_select %p266, %s265, 15
      %s268 = smul.addr %s267, 4
      %s269 = scalar_lea.vmem %s1, %s268
      %s270 = smul.u32 8, %s17
      %s271 = smul.u32 8, %s17
      %p272 = scmp.lt.s32.totalorder %s271, 15
      %s273 = scalar_select %p272, %s271, 15
      %s274 = smul.addr %s273, 4
      %s275 = scalar_lea.vmem %s6, %s274
      %s276 = smul.u32 8, %s17
      %v277 = vld [vmem:[%s263] sm:$0xf]
      %v278 = vld [vmem:[%s263 + $0x4] sm:$0xf]
      %v279 = vld [vmem:[%s263 + $0x8] sm:$0xf]
      %v280 = vld [vmem:[%s263 + $0xc] sm:$0xf]
      %v281 = vld [vmem:[%s263 + $0x10] sm:$0xf]
      %v282 = vld [vmem:[%s263 + $0x14] sm:$0xf]
      %v283 = vld [vmem:[%s263 + $0x18] sm:$0xf]
      %v284 = vld [vmem:[%s263 + $0x1c] sm:$0xf]
      %v285 = vunpack.c.l.bf16 %v277
      %v286 = vunpack.c.l.bf16 %v278
      %v287 = vunpack.c.l.bf16 %v279
      %v288 = vunpack.c.l.bf16 %v280
      %v289 = vunpack.c.l.bf16 %v281
      %v290 = vunpack.c.l.bf16 %v282
      %v291 = vunpack.c.l.bf16 %v283
      %v292 = vunpack.c.l.bf16 %v284
      %v293 = vld [vmem:[%s2] sm:$0x1]
      %v295 = vlaneseq
      %v296 = vshrl.u32 %v295, 7
      %v297 = vsub.s32 0, %v296
      %v298 = vrot.slane %v293, %v297
      %v300 = vmul.f32 %v285, %v298
      %v301 = vmul.f32 %v286, %v298
      %v302 = vmul.f32 %v287, %v298
      %v303 = vmul.f32 %v288, %v298
      %v304 = vmul.f32 %v289, %v298
      %v305 = vmul.f32 %v290, %v298
      %v306 = vmul.f32 %v291, %v298
      %v307 = vmul.f32 %v292, %v298
      %v308 = vld [vmem:[%s3] sm:$0x1]
      %v310 = vlaneseq
      %v311 = vshrl.u32 %v310, 7
      %v312 = vsub.s32 0, %v311
      %v313 = vrot.slane %v308, %v312
      %v315 = vadd.f32 %v300, %v313
      %v316 = vadd.f32 %v301, %v313
      %v317 = vadd.f32 %v302, %v313
      %v318 = vadd.f32 %v303, %v313
      %v319 = vadd.f32 %v304, %v313
      %v320 = vadd.f32 %v305, %v313
      %v321 = vadd.f32 %v306, %v313
      %v322 = vadd.f32 %v307, %v313
      %v323 = vld [vmem:[%s269] sm:$0xf]
      %v324 = vld [vmem:[%s269 + $0x4] sm:$0xf]
      %v325 = vld [vmem:[%s269 + $0x8] sm:$0xf]
      %v326 = vld [vmem:[%s269 + $0xc] sm:$0xf]
      %v327 = vld [vmem:[%s269 + $0x10] sm:$0xf]
      %v328 = vld [vmem:[%s269 + $0x14] sm:$0xf]
      %v329 = vld [vmem:[%s269 + $0x18] sm:$0xf]
      %v330 = vld [vmem:[%s269 + $0x1c] sm:$0xf]
      %v331 = vunpack.c.l.bf16 %v323
      %v332 = vunpack.c.l.bf16 %v324
      %v333 = vunpack.c.l.bf16 %v325
      %v334 = vunpack.c.l.bf16 %v326
      %v335 = vunpack.c.l.bf16 %v327
      %v336 = vunpack.c.l.bf16 %v328
      %v337 = vunpack.c.l.bf16 %v329
      %v338 = vunpack.c.l.bf16 %v330
      %v339 = vld [vmem:[%s4] sm:$0x1]
      %v341 = vlaneseq
      %v342 = vshrl.u32 %v341, 7
      %v343 = vsub.s32 0, %v342
      %v344 = vrot.slane %v339, %v343
      %v346 = vmul.f32 %v331, %v344
      %v347 = vmul.f32 %v332, %v344
      %v348 = vmul.f32 %v333, %v344
      %v349 = vmul.f32 %v334, %v344
      %v350 = vmul.f32 %v335, %v344
      %v351 = vmul.f32 %v336, %v344
      %v352 = vmul.f32 %v337, %v344
      %v353 = vmul.f32 %v338, %v344
      %v354 = vld [vmem:[%s5] sm:$0x1]
      %v356 = vlaneseq
      %v357 = vshrl.u32 %v356, 7
      %v358 = vsub.s32 0, %v357
      %v359 = vrot.slane %v354, %v358
      %v361 = vadd.f32 %v346, %v359
      %v362 = vadd.f32 %v347, %v359
      %v363 = vadd.f32 %v348, %v359
      %v364 = vadd.f32 %v349, %v359
      %v365 = vadd.f32 %v350, %v359
      %v366 = vadd.f32 %v351, %v359
      %v367 = vadd.f32 %v352, %v359
      %v368 = vadd.f32 %v353, %v359
      %v369 = vadd.f32 %v315, %v361
      %v370 = vadd.f32 %v316, %v362
      %v371 = vadd.f32 %v317, %v363
      %v372 = vadd.f32 %v318, %v364
      %v373 = vadd.f32 %v319, %v365
      %v374 = vadd.f32 %v320, %v366
      %v375 = vadd.f32 %v321, %v367
      %v376 = vadd.f32 %v322, %v368
      %v377 = vmax.f32 %v369, 0.0
      %v378 = vmax.f32 %v370, 0.0
      %v379 = vmax.f32 %v371, 0.0
      %v380 = vmax.f32 %v372, 0.0
      %v381 = vmax.f32 %v373, 0.0
      %v382 = vmax.f32 %v374, 0.0
      %v383 = vmax.f32 %v375, 0.0
      %v384 = vmax.f32 %v376, 0.0
      %v385 = vpack.c.bf16 %v378, %v377
      %v386 = vpack.c.bf16 %v380, %v379
      %v387 = vpack.c.bf16 %v382, %v381
      %v388 = vpack.c.bf16 %v384, %v383
      %v393 = vunpack.c.l.b16 %v385
      %v394 = vunpack.c.h.b16 %v385
      %v395 = vunpack.c.l.b16 %v386
      %v396 = vunpack.c.h.b16 %v386
      %v397 = vunpack.c.l.b16 %v387
      %v398 = vunpack.c.h.b16 %v387
      %v399 = vunpack.c.l.b16 %v388
      %v400 = vunpack.c.h.b16 %v388
      %v401 = vpack.c.b16 %v393, %v393
      %v402 = vpack.c.b16 %v394, %v394
      %v403 = vpack.c.b16 %v395, %v395
      %v404 = vpack.c.b16 %v396, %v396
      %v405 = vpack.c.b16 %v397, %v397
      %v406 = vpack.c.b16 %v398, %v398
      %v407 = vpack.c.b16 %v399, %v399
      %v408 = vpack.c.b16 %v400, %v400
      %417 = vst [vmem:[%s275] sm:$0xf] %v401
      %418 = vst [vmem:[%s275 + $0x4] sm:$0xf] %v402
      %419 = vst [vmem:[%s275 + $0x8] sm:$0xf] %v403
      %420 = vst [vmem:[%s275 + $0xc] sm:$0xf] %v404
      %421 = vst [vmem:[%s275 + $0x10] sm:$0xf] %v405
      %422 = vst [vmem:[%s275 + $0x14] sm:$0xf] %v406
      %423 = vst [vmem:[%s275 + $0x18] sm:$0xf] %v407
      %424 = vst [vmem:[%s275 + $0x1c] sm:$0xf] %v408
      %s425 = smul.u32 8, %s17
      %p426 = scmp.lt.s32.totalorder %s425, 15
      %s427 = scalar_select %p426, %s425, 15
      %s428 = smul.addr %s427, 4
      %s429 = scalar_lea.vmem %s6, %s428
      // Predicated region
      $region45: #{basic_block_forward.7} parent=43 // pred_check
        %p430 = pneg %p171
      $region46: #{basic_block_forward.7} parent=43 // pred_check_branch
        %432 = sbr.rel (%p430) target = $region48
      $region47: #{basic_block_forward.7} parent=43 // pred_region
        %s433 = smul.u32 8, %s17
      $region48: #{basic_block_forward.7} parent=43 // pred_fallthru
        _
    $region44: #{basic_block_forward.7} parent=5 // pred_fallthru
      _
    %p434 = scmp.le.s32.totalorder 2, %s12
    // Predicated region
    $region49: #{basic_block_forward.7} parent=5 // pred_check
      %p435 = pneg %p434
    $region50: #{basic_block_forward.7} parent=5 // pred_check_branch
      %437 = sbr.rel (%p435) target = $region52
    $region51: #{basic_block_forward.7} parent=5 // pred_region
      %s438 = ssub.s32 %s12, 2
      // Predicated region
      $region53: #{basic_block_forward.7} parent=51 // pred_check
        %p439 = pneg %p177
      $region54: #{basic_block_forward.7} parent=51 // pred_check_branch
        %441 = sbr.rel (%p439) target = $region56
      $region55: #{basic_block_forward.7} parent=51 // pred_region
        %s442 = smul.u32 8, %s18
        %p443 = scmp.lt.s32.totalorder %s442, 15
        %s444 = scalar_select %p443, %s442, 15
        %s445 = smul.addr %s444, 4
        %s446 = scalar_lea.vmem %s6, %s445
      $region56: #{basic_block_forward.7} parent=51 // pred_fallthru
        _
    $region52: #{basic_block_forward.7} parent=5 // pred_fallthru
      _
  $region6: #{basic_block_forward.7} parent=0 // loop_footer
    %s16 = sadd.s32 1, %s12
  $region7: #{basic_block_forward.7} parent=0 // loop_footer_branch
    %11 = sbr.rel target = $region3
  $region8: #{basic_block_forward.7} parent=0 // loop_exit
    _

// kernel: basic_block_forward.5
$region0: #{basic_block_forward.5}
  #allocation0 [shape = 'u32[]', space=smem, size = 0x4, offset = 0x4, fixed_abs, tag = 'smem constant byte address 0x4 - core index']
  #allocation1 [shape = 'u32[144,128]{1,0:T(1,128)}', space=vmem, size = 0x12000, scoped, tag = 'internal scratch']
  %s0 = inlined_call_operand.vmem [shape: bf16[128,1152], index: 0, kind: input, shape index: {}]
  %s1 = inlined_call_operand.vmem [shape: bf16[1152,128], index: 1, kind: input, shape index: {}]
  %s2 = inlined_call_operand.vmem [shape: bf16[128,128], index: 2, kind: output, shape index: {0}]
  %s3 = inlined_call_operand.vmem [shape: f32[16,128], index: 3, kind: output, shape index: {1}]
  %s4 = inlined_call_operand.vmem [shape: f32[16,128], index: 4, kind: output, shape index: {2}]
  %5 = xla_tuple %s2, %s3, %s4
  %s6 = sld [smem:[#allocation0]]
  $region57: #{basic_block_forward.5} parent=0
    _
  %s8 = ssub.s32 1, %s6
  %s9 = scalar_select 0, %s8, %s6
  loop: start=0, step=1, limit=4
  $region2: #{basic_block_forward.5} parent=0 // loop_pre_header
    _
  $region3: #{basic_block_forward.5} parent=0 // loop_header
    %s11 = sphi 0, %s15
    %p12 = scmp.ge.s32.totalorder %s11, 4
    %s21 = sphi 0, %s23
    %s24 = sphi 0, %s21
    %s25 = sphi 0, %s24
    %s41 = sphi 0, %s25
    %s45 = sphi 0, %s45
    %s47 = sphi 0, %s45
    %s48 = sphi 0, %s47
    %s62 = sphi 0, %s48
    %s68 = sphi 0, %s70
    %s71 = sphi 0, %s68
    %s72 = sphi 0, %s71
    %s88 = sphi 0, %s72
    %s94 = sphi 0, %s96
    %s97 = sphi 0, %s94
    %s98 = sphi 0, %s97
    %s114 = sphi 0, %s98
    %s120 = sphi 0, %s122
    %s123 = sphi 0, %s120
    %s124 = sphi 0, %s123
    %s140 = sphi 0, %s124
  $region4: #{basic_block_forward.5} parent=0 // loop_header_branch
    %14 = sbr.rel (%p12) target = $region8
  $region5: #{basic_block_forward.5} parent=0 // loop_body
    %s16 = ssub.s32 %s11, 1
    %s17 = ssub.s32 %s11, 2
    %s18 = sadd.s32 %s11, 1
    %s19 = ssub.s32 %s11, %s18
    %p20 = scmp.eq.s32.totalorder %s19, 0
    %s22 = sadd.s32 %s21, 1
    %s23 = scalar_select %p20, %s21, %s22
    %p26 = pneg %p20
    %p27 = scmp.eq.s32.totalorder %s11, 1
    %p28 = por %p26, %p27
    %p29 = scmp.ne.s32.totalorder %s21, %s24
    %p30 = scmp.eq.s32.totalorder %s11, 0
    %p31 = por %p29, %p30
    %p32 = scmp.ne.s32.totalorder %s21, %s24
    %p33 = scmp.eq.s32.totalorder %s16, 1
    %p34 = por %p32, %p33
    %p35 = scmp.ne.s32.totalorder %s24, %s25
    %p36 = scmp.eq.s32.totalorder %s16, 0
    %p37 = por %p35, %p36
    %p38 = scmp.ne.s32.totalorder %s24, %s25
    %p39 = scmp.eq.s32.totalorder %s17, 1
    %p40 = por %p38, %p39
    %p42 = scmp.ne.s32.totalorder %s25, %s41
    %p43 = scmp.eq.s32.totalorder %s17, 0
    %p44 = por %p42, %p43
    %s46 = sadd.s32 %s45, 1
    %p49 = scmp.eq.s32.totalorder %s11, 1
    %p50 = scmp.ne.s32.totalorder %s45, %s47
    %p51 = scmp.eq.s32.totalorder %s11, 0
    %p52 = por %p50, %p51
    %p53 = scmp.ne.s32.totalorder %s45, %s47
    %p54 = scmp.eq.s32.totalorder %s16, 1
    %p55 = por %p53, %p54
    %p56 = scmp.ne.s32.totalorder %s47, %s48
    %p57 = scmp.eq.s32.totalorder %s16, 0
    %p58 = por %p56, %p57
    %p59 = scmp.ne.s32.totalorder %s47, %s48
    %p60 = scmp.eq.s32.totalorder %s17, 1
    %p61 = por %p59, %p60
    %p63 = scmp.ne.s32.totalorder %s48, %s62
    %p64 = scmp.eq.s32.totalorder %s17, 0
    %p65 = por %p63, %p64
    %s66 = ssub.s32 %s11, %s18
    %p67 = scmp.eq.s32.totalorder %s66, 0
    %s69 = sadd.s32 %s68, 1
    %s70 = scalar_select %p67, %s68, %s69
    %p73 = pneg %p67
    %p74 = scmp.eq.s32.totalorder %s11, 1
    %p75 = por %p73, %p74
    %p76 = scmp.ne.s32.totalorder %s68, %s71
    %p77 = scmp.eq.s32.totalorder %s11, 0
    %p78 = por %p76, %p77
    %p79 = scmp.ne.s32.totalorder %s68, %s71
    %p80 = scmp.eq.s32.totalorder %s16, 1
    %p81 = por %p79, %p80
    %p82 = scmp.ne.s32.totalorder %s71, %s72
    %p83 = scmp.eq.s32.totalorder %s16, 0
    %p84 = por %p82, %p83
    %p85 = scmp.ne.s32.totalorder %s71, %s72
    %p86 = scmp.eq.s32.totalorder %s17, 1
    %p87 = por %p85, %p86
    %p89 = scmp.ne.s32.totalorder %s72, %s88
    %p90 = scmp.eq.s32.totalorder %s17, 0
    %p91 = por %p89, %p90
    %s92 = ssub.s32 %s11, %s18
    %p93 = scmp.eq.s32.totalorder %s92, 0
    %s95 = sadd.s32 %s94, 1
    %s96 = scalar_select %p93, %s94, %s95
    %p99 = pneg %p93
    %p100 = scmp.eq.s32.totalorder %s11, 1
    %p101 = por %p99, %p100
    %p102 = scmp.ne.s32.totalorder %s94, %s97
    %p103 = scmp.eq.s32.totalorder %s11, 0
    %p104 = por %p102, %p103
    %p105 = scmp.ne.s32.totalorder %s94, %s97
    %p106 = scmp.eq.s32.totalorder %s16, 1
    %p107 = por %p105, %p106
    %p108 = scmp.ne.s32.totalorder %s97, %s98
    %p109 = scmp.eq.s32.totalorder %s16, 0
    %p110 = por %p108, %p109
    %p111 = scmp.ne.s32.totalorder %s97, %s98
    %p112 = scmp.eq.s32.totalorder %s17, 1
    %p113 = por %p111, %p112
    %p115 = scmp.ne.s32.totalorder %s98, %s114
    %p116 = scmp.eq.s32.totalorder %s17, 0
    %p117 = por %p115, %p116
    %s118 = ssub.s32 %s11, %s18
    %p119 = scmp.eq.s32.totalorder %s118, 0
    %s121 = sadd.s32 %s120, 1
    %s122 = scalar_select %p119, %s120, %s121
    %p125 = pneg %p119
    %p126 = scmp.eq.s32.totalorder %s11, 1
    %p127 = por %p125, %p126
    %p128 = scmp.ne.s32.totalorder %s120, %s123
    %p129 = scmp.eq.s32.totalorder %s11, 0
    %p130 = por %p128, %p129
    %p131 = scmp.ne.s32.totalorder %s120, %s123
    %p132 = scmp.eq.s32.totalorder %s16, 1
    %p133 = por %p131, %p132
    %p134 = scmp.ne.s32.totalorder %s123, %s124
    %p135 = scmp.eq.s32.totalorder %s16, 0
    %p136 = por %p134, %p135
    %p137 = scmp.ne.s32.totalorder %s123, %s124
    %p138 = scmp.eq.s32.totalorder %s17, 1
    %p139 = por %p137, %p138
    %p141 = scmp.ne.s32.totalorder %s124, %s140
    %p142 = scmp.eq.s32.totalorder %s17, 0
    %p143 = por %p141, %p142
    %p144 = scmp.le.s32.totalorder 1, %s11
    %p145 = scmp.lt.s32.totalorder %s11, 3
    %p146 = pnand %p144, %p145
    %p147 = pneg %p146
    // Predicated region
    $region9: #{basic_block_forward.5} parent=5 // pred_check
      _
    $region10: #{basic_block_forward.5} parent=5 // pred_check_branch
      %149 = sbr.rel (%p146) target = $region12
    $region11: #{basic_block_forward.5} parent=5 // pred_region
      %s150 = ssub.s32 %s11, 1
      // Predicated region
      $region13: #{basic_block_forward.5} parent=11 // pred_check
        %p151 = pneg %p58
      $region14: #{basic_block_forward.5} parent=11 // pred_check_branch
        %153 = sbr.rel (%p151) target = $region16
      $region15: #{basic_block_forward.5} parent=11 // pred_region
        _
      $region16: #{basic_block_forward.5} parent=11 // pred_fallthru
        _
    $region12: #{basic_block_forward.5} parent=5 // pred_fallthru
      _
    %p154 = scmp.lt.s32.totalorder %s11, 2
    // Predicated region
    $region17: #{basic_block_forward.5} parent=5 // pred_check
      %p155 = pneg %p154
    $region18: #{basic_block_forward.5} parent=5 // pred_check_branch
      %157 = sbr.rel (%p155) target = $region20
    $region19: #{basic_block_forward.5} parent=5 // pred_region
      // Predicated region
      $region21: #{basic_block_forward.5} parent=19 // pred_check
        %p158 = pneg %p31
      $region22: #{basic_block_forward.5} parent=19 // pred_check_branch
        %160 = sbr.rel (%p158) target = $region24
      $region23: #{basic_block_forward.5} parent=19 // pred_region
        %s161 = smul.u32 8, %s11
        %p162 = scmp.lt.s32.totalorder %s161, 15
        %s163 = scalar_select %p162, %s161, 15
        %s164 = smul.addr %s163, 9
        %s165 = smul.addr %s164, 4
        %s166 = scalar_lea.vmem %s0, %s165
        %s167 = smul.u32 8, %s11
      $region24: #{basic_block_forward.5} parent=19 // pred_fallthru
        _
    $region20: #{basic_block_forward.5} parent=5 // pred_fallthru
      _
    %p168 = scmp.le.s32.totalorder 1, %s11
    %p169 = scmp.lt.s32.totalorder %s11, 3
    %p170 = pnand %p168, %p169
    %p171 = pneg %p170
    // Predicated region
    $region25: #{basic_block_forward.5} parent=5 // pred_check
      _
    $region26: #{basic_block_forward.5} parent=5 // pred_check_branch
      %173 = sbr.rel (%p170) target = $region28
    $region27: #{basic_block_forward.5} parent=5 // pred_region
      %s174 = ssub.s32 %s11, 1
      %s175 = smul.u32 8, %s16
      %p176 = scmp.lt.s32.totalorder %s175, 15
      %s177 = scalar_select %p176, %s175, 15
      %s178 = smul.addr %s177, 9
      %s179 = smul.addr %s178, 4
      %s180 = scalar_lea.vmem %s0, %s179
      %p181 = pneg %p37
      %p182 = pneg %p34
      %p183 = pneg %p58
      %p184 = pneg %p55
      %p185 = pneg %p84
      %p186 = pneg %p81
      %s187 = smul.u32 8, %s16
      %p188 = scmp.lt.s32.totalorder %s187, 15
      %s189 = scalar_select %p188, %s187, 15
      %s190 = smul.addr %s189, 4
      %s191 = scalar_lea.vmem %s2, %s190
      %p192 = pneg %p110
      %p193 = pneg %p107
      %p194 = scmp.lt.s32.totalorder %s16, 1
      %s195 = scalar_select %p194, %s16, 1
      %s196 = smul.addr %s195, 8
      %s197 = scalar_lea.vmem %s3, %s196
      %p198 = pneg %p136
      %p199 = pneg %p133
      %p200 = scmp.lt.s32.totalorder %s16, 1
      %s201 = scalar_select %p200, %s16, 1
      %s202 = smul.addr %s201, 8
      %s203 = scalar_lea.vmem %s4, %s202
      %s204 = smul.u32 8, %s16
      %p205 = scmp.lt.s32.totalorder %s204, 15
      %s206 = scalar_select %p205, %s204, 15
      %s207 = smul.addr %s206, 9
      %s208 = smul.addr %s207, 4
      %s209 = scalar_lea.vmem %s0, %s208
      %s210 = smul.u32 8, %s16
      %s211 = smul.u32 8, %s16
      %p212 = scmp.lt.s32.totalorder %s211, 15
      %s213 = scalar_select %p212, %s211, 15
      %s214 = smul.addr %s213, 4
      %s215 = scalar_lea.vmem %s2, %s214
      %s216 = smul.u32 8, %s16
      %p217 = scmp.lt.s32.totalorder %s16, 1
      %s218 = scalar_select %p217, %s16, 1
      %s219 = smul.addr %s218, 8
      %s220 = scalar_lea.vmem %s3, %s219
      %p221 = scmp.lt.s32.totalorder %s16, 1
      %s222 = scalar_select %p221, %s16, 1
      %s223 = smul.addr %s222, 8
      %s224 = scalar_lea.vmem %s4, %s223
      %v226 = vld [vmem:[%s209] sm:$0xff]
      %v227 = vld [vmem:[%s209 + $0x8] sm:$0xff]
      %v228 = vld [vmem:[%s209 + $0x10] sm:$0xff]
      %v229 = vld [vmem:[%s209 + $0x18] sm:$0xff]
      %v230 = vld [vmem:[%s209 + $0x20] sm:$0xf]
      %v231 = vld [vmem:[%s209 + $0x24] sm:$0xff]
      %v232 = vld [vmem:[%s209 + $0x2c] sm:$0xff]
      %v233 = vld [vmem:[%s209 + $0x34] sm:$0xff]
      %v234 = vld [vmem:[%s209 + $0x3c] sm:$0xff]
      %v235 = vld [vmem:[%s209 + $0x44] sm:$0xf]
      %v236 = vld [vmem:[%s209 + $0x48] sm:$0xff]
      %v237 = vld [vmem:[%s209 + $0x50] sm:$0xff]
      %v238 = vld [vmem:[%s209 + $0x58] sm:$0xff]
      %v239 = vld [vmem:[%s209 + $0x60] sm:$0xff]
      %v240 = vld [vmem:[%s209 + $0x68] sm:$0xf]
      %v241 = vld [vmem:[%s209 + $0x6c] sm:$0xff]
      %v242 = vld [vmem:[%s209 + $0x74] sm:$0xff]
      %v243 = vld [vmem:[%s209 + $0x7c] sm:$0xff]
      %v244 = vld [vmem:[%s209 + $0x84] sm:$0xff]
      %v245 = vld [vmem:[%s209 + $0x8c] sm:$0xf]
      %v246 = vld [vmem:[%s209 + $0x90] sm:$0xff]
      %v247 = vld [vmem:[%s209 + $0x98] sm:$0xff]
      %v248 = vld [vmem:[%s209 + $0xa0] sm:$0xff]
      %v249 = vld [vmem:[%s209 + $0xa8] sm:$0xff]
      %v250 = vld [vmem:[%s209 + $0xb0] sm:$0xf]
      %v251 = vld [vmem:[%s209 + $0xb4] sm:$0xff]
      %v252 = vld [vmem:[%s209 + $0xbc] sm:$0xff]
      %v253 = vld [vmem:[%s209 + $0xc4] sm:$0xff]
      %v254 = vld [vmem:[%s209 + $0xcc] sm:$0xff]
      %v255 = vld [vmem:[%s209 + $0xd4] sm:$0xf]
      %v256 = vld [vmem:[%s209 + $0xd8] sm:$0xff]
      %v257 = vld [vmem:[%s209 + $0xe0] sm:$0xff]
      %v258 = vld [vmem:[%s209 + $0xe8] sm:$0xff]
      %v259 = vld [vmem:[%s209 + $0xf0] sm:$0xff]
      %v260 = vld [vmem:[%s209 + $0xf8] sm:$0xf]
      %v261 = vld [vmem:[%s209 + $0xfc] sm:$0xff]
      %v262 = vld [vmem:[%s209 + $0x104] sm:$0xff]
      %v263 = vld [vmem:[%s209 + $0x10c] sm:$0xff]
      %v264 = vld [vmem:[%s209 + $0x114] sm:$0xff]
      %v265 = vld [vmem:[%s209 + $0x11c] sm:$0xf]
      %v266 = vld [vmem:[%s1] sm:$0xf]
      %v267 = vld [vmem:[%s1 + $0x4] sm:$0xf]
      %v268 = vld [vmem:[%s1 + $0x8] sm:$0xf]
      %v269 = vld [vmem:[%s1 + $0xc] sm:$0xf]
      %v270 = vld [vmem:[%s1 + $0x10] sm:$0xf]
      %v271 = vld [vmem:[%s1 + $0x14] sm:$0xf]
      %v272 = vld [vmem:[%s1 + $0x18] sm:$0xf]
      %v273 = vld [vmem:[%s1 + $0x1c] sm:$0xf]
      %v274 = vld [vmem:[%s1 + $0x20] sm:$0xf]
      %v275 = vld [vmem:[%s1 + $0x24] sm:$0xf]
      %v276 = vld [vmem:[%s1 + $0x28] sm:$0xf]
      %v277 = vld [vmem:[%s1 + $0x2c] sm:$0xf]
      %v278 = vld [vmem:[%s1 + $0x30] sm:$0xf]
      %v279 = vld [vmem:[%s1 + $0x34] sm:$0xf]
      %v280 = vld [vmem:[%s1 + $0x38] sm:$0xf]
      %v281 = vld [vmem:[%s1 + $0x3c] sm:$0xf]
      %v282 = vld [vmem:[%s1 + $0x40] sm:$0xf]
      %v283 = vld [vmem:[%s1 + $0x44] sm:$0xf]
      %v284 = vld [vmem:[%s1 + $0x48] sm:$0xf]
      %v285 = vld [vmem:[%s1 + $0x4c] sm:$0xf]
      %v286 = vld [vmem:[%s1 + $0x50] sm:$0xf]
      %v287 = vld [vmem:[%s1 + $0x54] sm:$0xf]
      %v288 = vld [vmem:[%s1 + $0x58] sm:$0xf]
      %v289 = vld [vmem:[%s1 + $0x5c] sm:$0xf]
      %v290 = vld [vmem:[%s1 + $0x60] sm:$0xf]
      %v291 = vld [vmem:[%s1 + $0x64] sm:$0xf]
      %v292 = vld [vmem:[%s1 + $0x68] sm:$0xf]
      %v293 = vld [vmem:[%s1 + $0x6c] sm:$0xf]
      %v294 = vld [vmem:[%s1 + $0x70] sm:$0xf]
      %v295 = vld [vmem:[%s1 + $0x74] sm:$0xf]
      %v296 = vld [vmem:[%s1 + $0x78] sm:$0xf]
      %v297 = vld [vmem:[%s1 + $0x7c] sm:$0xf]
      %v298 = vld [vmem:[%s1 + $0x80] sm:$0xf]
      %v299 = vld [vmem:[%s1 + $0x84] sm:$0xf]
      %v300 = vld [vmem:[%s1 + $0x88] sm:$0xf]
      %v301 = vld [vmem:[%s1 + $0x8c] sm:$0xf]
      %v302 = vld [vmem:[%s1 + $0x90] sm:$0xf]
      %v303 = vld [vmem:[%s1 + $0x94] sm:$0xf]
      %v304 = vld [vmem:[%s1 + $0x98] sm:$0xf]
      %v305 = vld [vmem:[%s1 + $0x9c] sm:$0xf]
      %v306 = vld [vmem:[%s1 + $0xa0] sm:$0xf]
      %v307 = vld [vmem:[%s1 + $0xa4] sm:$0xf]
      %v308 = vld [vmem:[%s1 + $0xa8] sm:$0xf]
      %v309 = vld [vmem:[%s1 + $0xac] sm:$0xf]
      %v310 = vld [vmem:[%s1 + $0xb0] sm:$0xf]
      %v311 = vld [vmem:[%s1 + $0xb4] sm:$0xf]
      %v312 = vld [vmem:[%s1 + $0xb8] sm:$0xf]
      %v313 = vld [vmem:[%s1 + $0xbc] sm:$0xf]
      %v314 = vld [vmem:[%s1 + $0xc0] sm:$0xf]
      %v315 = vld [vmem:[%s1 + $0xc4] sm:$0xf]
      %v316 = vld [vmem:[%s1 + $0xc8] sm:$0xf]
      %v317 = vld [vmem:[%s1 + $0xcc] sm:$0xf]
      %v318 = vld [vmem:[%s1 + $0xd0] sm:$0xf]
      %v319 = vld [vmem:[%s1 + $0xd4] sm:$0xf]
      %v320 = vld [vmem:[%s1 + $0xd8] sm:$0xf]
      %v321 = vld [vmem:[%s1 + $0xdc] sm:$0xf]
      %v322 = vld [vmem:[%s1 + $0xe0] sm:$0xf]
      %v323 = vld [vmem:[%s1 + $0xe4] sm:$0xf]
      %v324 = vld [vmem:[%s1 + $0xe8] sm:$0xf]
      %v325 = vld [vmem:[%s1 + $0xec] sm:$0xf]
      %v326 = vld [vmem:[%s1 + $0xf0] sm:$0xf]
      %v327 = vld [vmem:[%s1 + $0xf4] sm:$0xf]
      %v328 = vld [vmem:[%s1 + $0xf8] sm:$0xf]
      %v329 = vld [vmem:[%s1 + $0xfc] sm:$0xf]
      %v330 = vld [vmem:[%s1 + $0x100] sm:$0xf]
      %v331 = vld [vmem:[%s1 + $0x104] sm:$0xf]
      %v332 = vld [vmem:[%s1 + $0x108] sm:$0xf]
      %v333 = vld [vmem:[%s1 + $0x10c] sm:$0xf]
      %v334 = vld [vmem:[%s1 + $0x110] sm:$0xf]
      %v335 = vld [vmem:[%s1 + $0x114] sm:$0xf]
      %v336 = vld [vmem:[%s1 + $0x118] sm:$0xf]
      %v337 = vld [vmem:[%s1 + $0x11c] sm:$0xf]
      %v338 = vld [vmem:[%s1 + $0x120] sm:$0xf]
      %v339 = vld [vmem:[%s1 + $0x124] sm:$0xf]
      %v340 = vld [vmem:[%s1 + $0x128] sm:$0xf]
      %v341 = vld [vmem:[%s1 + $0x12c] sm:$0xf]
      %v342 = vld [vmem:[%s1 + $0x130] sm:$0xf]
      %v343 = vld [vmem:[%s1 + $0x134] sm:$0xf]
      %v344 = vld [vmem:[%s1 + $0x138] sm:$0xf]
      %v345 = vld [vmem:[%s1 + $0x13c] sm:$0xf]
      %v346 = vld [vmem:[%s1 + $0x140] sm:$0xf]
      %v347 = vld [vmem:[%s1 + $0x144] sm:$0xf]
      %v348 = vld [vmem:[%s1 + $0x148] sm:$0xf]
      %v349 = vld [vmem:[%s1 + $0x14c] sm:$0xf]
      %v350 = vld [vmem:[%s1 + $0x150] sm:$0xf]
      %v351 = vld [vmem:[%s1 + $0x154] sm:$0xf]
      %v352 = vld [vmem:[%s1 + $0x158] sm:$0xf]
      %v353 = vld [vmem:[%s1 + $0x15c] sm:$0xf]
      %v354 = vld [vmem:[%s1 + $0x160] sm:$0xf]
      %v355 = vld [vmem:[%s1 + $0x164] sm:$0xf]
      %v356 = vld [vmem:[%s1 + $0x168] sm:$0xf]
      %v357 = vld [vmem:[%s1 + $0x16c] sm:$0xf]
      %v358 = vld [vmem:[%s1 + $0x170] sm:$0xf]
      %v359 = vld [vmem:[%s1 + $0x174] sm:$0xf]
      %v360 = vld [vmem:[%s1 + $0x178] sm:$0xf]
      %v361 = vld [vmem:[%s1 + $0x17c] sm:$0xf]
      %v362 = vld [vmem:[%s1 + $0x180] sm:$0xf]
      %v363 = vld [vmem:[%s1 + $0x184] sm:$0xf]
      %v364 = vld [vmem:[%s1 + $0x188] sm:$0xf]
      %v365 = vld [vmem:[%s1 + $0x18c] sm:$0xf]
      %v366 = vld [vmem:[%s1 + $0x190] sm:$0xf]
      %v367 = vld [vmem:[%s1 + $0x194] sm:$0xf]
      %v368 = vld [vmem:[%s1 + $0x198] sm:$0xf]
      %v369 = vld [vmem:[%s1 + $0x19c] sm:$0xf]
      %v370 = vld [vmem:[%s1 + $0x1a0] sm:$0xf]
      %v371 = vld [vmem:[%s1 + $0x1a4] sm:$0xf]
      %v372 = vld [vmem:[%s1 + $0x1a8] sm:$0xf]
      %v373 = vld [vmem:[%s1 + $0x1ac] sm:$0xf]
      %v374 = vld [vmem:[%s1 + $0x1b0] sm:$0xf]
      %v375 = vld [vmem:[%s1 + $0x1b4] sm:$0xf]
      %v376 = vld [vmem:[%s1 + $0x1b8] sm:$0xf]
      %v377 = vld [vmem:[%s1 + $0x1bc] sm:$0xf]
      %v378 = vld [vmem:[%s1 + $0x1c0] sm:$0xf]
      %v379 = vld [vmem:[%s1 + $0x1c4] sm:$0xf]
      %v380 = vld [vmem:[%s1 + $0x1c8] sm:$0xf]
      %v381 = vld [vmem:[%s1 + $0x1cc] sm:$0xf]
      %v382 = vld [vmem:[%s1 + $0x1d0] sm:$0xf]
      %v383 = vld [vmem:[%s1 + $0x1d4] sm:$0xf]
      %v384 = vld [vmem:[%s1 + $0x1d8] sm:$0xf]
      %v385 = vld [vmem:[%s1 + $0x1dc] sm:$0xf]
      %v386 = vld [vmem:[%s1 + $0x1e0] sm:$0xf]
      %v387 = vld [vmem:[%s1 + $0x1e4] sm:$0xf]
      %v388 = vld [vmem:[%s1 + $0x1e8] sm:$0xf]
      %v389 = vld [vmem:[%s1 + $0x1ec] sm:$0xf]
      %v390 = vld [vmem:[%s1 + $0x1f0] sm:$0xf]
      %v391 = vld [vmem:[%s1 + $0x1f4] sm:$0xf]
      %v392 = vld [vmem:[%s1 + $0x1f8] sm:$0xf]
      %v393 = vld [vmem:[%s1 + $0x1fc] sm:$0xf]
      %v394 = vld [vmem:[%s1 + $0x200] sm:$0xf]
      %v395 = vld [vmem:[%s1 + $0x204] sm:$0xf]
      %v396 = vld [vmem:[%s1 + $0x208] sm:$0xf]
      %v397 = vld [vmem:[%s1 + $0x20c] sm:$0xf]
      %v398 = vld [vmem:[%s1 + $0x210] sm:$0xf]
      %v399 = vld [vmem:[%s1 + $0x214] sm:$0xf]
      %v400 = vld [vmem:[%s1 + $0x218] sm:$0xf]
      %v401 = vld [vmem:[%s1 + $0x21c] sm:$0xf]
      %v402 = vld [vmem:[%s1 + $0x220] sm:$0xf]
      %v403 = vld [vmem:[%s1 + $0x224] sm:$0xf]
      %v404 = vld [vmem:[%s1 + $0x228] sm:$0xf]
      %v405 = vld [vmem:[%s1 + $0x22c] sm:$0xf]
      %v406 = vld [vmem:[%s1 + $0x230] sm:$0xf]
      %v407 = vld [vmem:[%s1 + $0x234] sm:$0xf]
      %v408 = vld [vmem:[%s1 + $0x238] sm:$0xf]
      %v409 = vld [vmem:[%s1 + $0x23c] sm:$0xf]
      %v450 = vunpack.c.l.b16 %v226
      %v451 = vunpack.c.h.b16 %v226
      %v452 = vunpack.c.l.b16 %v227
      %v453 = vunpack.c.h.b16 %v227
      %v454 = vunpack.c.l.b16 %v228
      %v455 = vunpack.c.h.b16 %v228
      %v456 = vunpack.c.l.b16 %v229
      %v457 = vunpack.c.h.b16 %v229
      %v458 = vunpack.c.l.b16 %v230
      %v459 = vunpack.c.l.b16 %v231
      %v460 = vunpack.c.h.b16 %v231
      %v461 = vunpack.c.l.b16 %v232
      %v462 = vunpack.c.h.b16 %v232
      %v463 = vunpack.c.l.b16 %v233
      %v464 = vunpack.c.h.b16 %v233
      %v465 = vunpack.c.l.b16 %v234
      %v466 = vunpack.c.h.b16 %v234
      %v467 = vunpack.c.l.b16 %v235
      %v468 = vunpack.c.l.b16 %v236
      %v469 = vunpack.c.h.b16 %v236
      %v470 = vunpack.c.l.b16 %v237
      %v471 = vunpack.c.h.b16 %v237
      %v472 = vunpack.c.l.b16 %v238
      %v473 = vunpack.c.h.b16 %v238
      %v474 = vunpack.c.l.b16 %v239
      %v475 = vunpack.c.h.b16 %v239
      %v476 = vunpack.c.l.b16 %v240
      %v477 = vunpack.c.l.b16 %v241
      %v478 = vunpack.c.h.b16 %v241
      %v479 = vunpack.c.l.b16 %v242
      %v480 = vunpack.c.h.b16 %v242
      %v481 = vunpack.c.l.b16 %v243
      %v482 = vunpack.c.h.b16 %v243
      %v483 = vunpack.c.l.b16 %v244
      %v484 = vunpack.c.h.b16 %v244
      %v485 = vunpack.c.l.b16 %v245
      %v486 = vunpack.c.l.b16 %v246
      %v487 = vunpack.c.h.b16 %v246
      %v488 = vunpack.c.l.b16 %v247
      %v489 = vunpack.c.h.b16 %v247
      %v490 = vunpack.c.l.b16 %v248
      %v491 = vunpack.c.h.b16 %v248
      %v492 = vunpack.c.l.b16 %v249
      %v493 = vunpack.c.h.b16 %v249
      %v494 = vunpack.c.l.b16 %v250
      %v495 = vunpack.c.l.b16 %v251
      %v496 = vunpack.c.h.b16 %v251
      %v497 = vunpack.c.l.b16 %v252
      %v498 = vunpack.c.h.b16 %v252
      %v499 = vunpack.c.l.b16 %v253
      %v500 = vunpack.c.h.b16 %v253
      %v501 = vunpack.c.l.b16 %v254
      %v502 = vunpack.c.h.b16 %v254
      %v503 = vunpack.c.l.b16 %v255
      %v504 = vunpack.c.l.b16 %v256
      %v505 = vunpack.c.h.b16 %v256
      %v506 = vunpack.c.l.b16 %v257
      %v507 = vunpack.c.h.b16 %v257
      %v508 = vunpack.c.l.b16 %v258
      %v509 = vunpack.c.h.b16 %v258
      %v510 = vunpack.c.l.b16 %v259
      %v511 = vunpack.c.h.b16 %v259
      %v512 = vunpack.c.l.b16 %v260
      %v513 = vunpack.c.l.b16 %v261
      %v514 = vunpack.c.h.b16 %v261
      %v515 = vunpack.c.l.b16 %v262
      %v516 = vunpack.c.h.b16 %v262
      %v517 = vunpack.c.l.b16 %v263
      %v518 = vunpack.c.h.b16 %v263
      %v519 = vunpack.c.l.b16 %v264
      %v520 = vunpack.c.h.b16 %v264
      %v521 = vunpack.c.l.b16 %v265
      %v522 = vpack.c.b16 %v459, %v450
      %v523 = vpack.c.b16 %v460, %v451
      %v524 = vpack.c.b16 %v461, %v452
      %v525 = vpack.c.b16 %v462, %v453
      %v526 = vpack.c.b16 %v463, %v454
      %v527 = vpack.c.b16 %v464, %v455
      %v528 = vpack.c.b16 %v465, %v456
      %v529 = vpack.c.b16 %v466, %v457
      %v530 = vpack.c.b16 %v467, %v458
      %v531 = vpack.c.b16 %v477, %v468
      %v532 = vpack.c.b16 %v478, %v469
      %v533 = vpack.c.b16 %v479, %v470
      %v534 = vpack.c.b16 %v480, %v471
      %v535 = vpack.c.b16 %v481, %v472
      %v536 = vpack.c.b16 %v482, %v473
      %v537 = vpack.c.b16 %v483, %v474
      %v538 = vpack.c.b16 %v484, %v475
      %v539 = vpack.c.b16 %v485, %v476
      %v540 = vpack.c.b16 %v495, %v486
      %v541 = vpack.c.b16 %v496, %v487
      %v542 = vpack.c.b16 %v497, %v488
      %v543 = vpack.c.b16 %v498, %v489
      %v544 = vpack.c.b16 %v499, %v490
      %v545 = vpack.c.b16 %v500, %v491
      %v546 = vpack.c.b16 %v501, %v492
      %v547 = vpack.c.b16 %v502, %v493
      %v548 = vpack.c.b16 %v503, %v494
      %v549 = vpack.c.b16 %v513, %v504
      %v550 = vpack.c.b16 %v514, %v505
      %v551 = vpack.c.b16 %v515, %v506
      %v552 = vpack.c.b16 %v516, %v507
      %v553 = vpack.c.b16 %v517, %v508
      %v554 = vpack.c.b16 %v518, %v509
      %v555 = vpack.c.b16 %v519, %v510
      %v556 = vpack.c.b16 %v520, %v511
      %v557 = vpack.c.b16 %v521, %v512
      %v738 = vunpack.c.l.b16 %v266
      %v739 = vunpack.c.l.b16 %v267
      %v740 = vunpack.c.l.b16 %v268
      %v741 = vunpack.c.l.b16 %v269
      %v742 = vunpack.c.l.b16 %v270
      %v743 = vunpack.c.l.b16 %v271
      %v744 = vunpack.c.l.b16 %v272
      %v745 = vunpack.c.l.b16 %v273
      %v746 = vunpack.c.l.b16 %v274
      %v747 = vunpack.c.l.b16 %v275
      %v748 = vunpack.c.l.b16 %v276
      %v749 = vunpack.c.l.b16 %v277
      %v750 = vunpack.c.l.b16 %v278
      %v751 = vunpack.c.l.b16 %v279
      %v752 = vunpack.c.l.b16 %v280
      %v753 = vunpack.c.l.b16 %v281
      %v754 = vunpack.c.l.b16 %v282
      %v755 = vunpack.c.l.b16 %v283
      %v756 = vunpack.c.l.b16 %v284
      %v757 = vunpack.c.l.b16 %v285
      %v758 = vunpack.c.l.b16 %v286
      %v759 = vunpack.c.l.b16 %v287
      %v760 = vunpack.c.l.b16 %v288
      %v761 = vunpack.c.l.b16 %v289
      %v762 = vunpack.c.l.b16 %v290
      %v763 = vunpack.c.l.b16 %v291
      %v764 = vunpack.c.l.b16 %v292
      %v765 = vunpack.c.l.b16 %v293
      %v766 = vunpack.c.l.b16 %v294
      %v767 = vunpack.c.l.b16 %v295
      %v768 = vunpack.c.l.b16 %v296
      %v769 = vunpack.c.l.b16 %v297
      %v770 = vunpack.c.l.b16 %v298
      %v771 = vunpack.c.l.b16 %v299
      %v772 = vunpack.c.l.b16 %v300
      %v773 = vunpack.c.l.b16 %v301
      %v774 = vunpack.c.l.b16 %v302
      %v775 = vunpack.c.l.b16 %v303
      %v776 = vunpack.c.l.b16 %v304
      %v777 = vunpack.c.l.b16 %v305
      %v778 = vunpack.c.l.b16 %v306
      %v779 = vunpack.c.l.b16 %v307
      %v780 = vunpack.c.l.b16 %v308
      %v781 = vunpack.c.l.b16 %v309
      %v782 = vunpack.c.l.b16 %v310
      %v783 = vunpack.c.l.b16 %v311
      %v784 = vunpack.c.l.b16 %v312
      %v785 = vunpack.c.l.b16 %v313
      %v786 = vunpack.c.l.b16 %v314
      %v787 = vunpack.c.l.b16 %v315
      %v788 = vunpack.c.l.b16 %v316
      %v789 = vunpack.c.l.b16 %v317
      %v790 = vunpack.c.l.b16 %v318
      %v791 = vunpack.c.l.b16 %v319
      %v792 = vunpack.c.l.b16 %v320
      %v793 = vunpack.c.l.b16 %v321
      %v794 = vunpack.c.l.b16 %v322
      %v795 = vunpack.c.l.b16 %v323
      %v796 = vunpack.c.l.b16 %v324
      %v797 = vunpack.c.l.b16 %v325
      %v798 = vunpack.c.l.b16 %v326
      %v799 = vunpack.c.l.b16 %v327
      %v800 = vunpack.c.l.b16 %v328
      %v801 = vunpack.c.l.b16 %v329
      %v802 = vunpack.c.l.b16 %v330
      %v803 = vunpack.c.l.b16 %v331
      %v804 = vunpack.c.l.b16 %v332
      %v805 = vunpack.c.l.b16 %v333
      %v806 = vunpack.c.l.b16 %v334
      %v807 = vunpack.c.l.b16 %v335
      %v808 = vunpack.c.l.b16 %v336
      %v809 = vunpack.c.l.b16 %v337
      %v810 = vunpack.c.l.b16 %v338
      %v811 = vunpack.c.l.b16 %v339
      %v812 = vunpack.c.l.b16 %v340
      %v813 = vunpack.c.l.b16 %v341
      %v814 = vunpack.c.l.b16 %v342
      %v815 = vunpack.c.l.b16 %v343
      %v816 = vunpack.c.l.b16 %v344
      %v817 = vunpack.c.l.b16 %v345
      %v818 = vunpack.c.l.b16 %v346
      %v819 = vunpack.c.l.b16 %v347
      %v820 = vunpack.c.l.b16 %v348
      %v821 = vunpack.c.l.b16 %v349
      %v822 = vunpack.c.l.b16 %v350
      %v823 = vunpack.c.l.b16 %v351
      %v824 = vunpack.c.l.b16 %v352
      %v825 = vunpack.c.l.b16 %v353
      %v826 = vunpack.c.l.b16 %v354
      %v827 = vunpack.c.l.b16 %v355
      %v828 = vunpack.c.l.b16 %v356
      %v829 = vunpack.c.l.b16 %v357
      %v830 = vunpack.c.l.b16 %v358
      %v831 = vunpack.c.l.b16 %v359
      %v832 = vunpack.c.l.b16 %v360
      %v833 = vunpack.c.l.b16 %v361
      %v834 = vunpack.c.l.b16 %v362
      %v835 = vunpack.c.l.b16 %v363
      %v836 = vunpack.c.l.b16 %v364
      %v837 = vunpack.c.l.b16 %v365
      %v838 = vunpack.c.l.b16 %v366
      %v839 = vunpack.c.l.b16 %v367
      %v840 = vunpack.c.l.b16 %v368
      %v841 = vunpack.c.l.b16 %v369
      %v842 = vunpack.c.l.b16 %v370
      %v843 = vunpack.c.l.b16 %v371
      %v844 = vunpack.c.l.b16 %v372
      %v845 = vunpack.c.l.b16 %v373
      %v846 = vunpack.c.l.b16 %v374
      %v847 = vunpack.c.l.b16 %v375
      %v848 = vunpack.c.l.b16 %v376
      %v849 = vunpack.c.l.b16 %v377
      %v850 = vunpack.c.l.b16 %v378
      %v851 = vunpack.c.l.b16 %v379
      %v852 = vunpack.c.l.b16 %v380
      %v853 = vunpack.c.l.b16 %v381
      %v854 = vunpack.c.l.b16 %v382
      %v855 = vunpack.c.l.b16 %v383
      %v856 = vunpack.c.l.b16 %v384
      %v857 = vunpack.c.l.b16 %v385
      %v858 = vunpack.c.l.b16 %v386
      %v859 = vunpack.c.l.b16 %v387
      %v860 = vunpack.c.l.b16 %v388
      %v861 = vunpack.c.l.b16 %v389
      %v862 = vunpack.c.l.b16 %v390
      %v863 = vunpack.c.l.b16 %v391
      %v864 = vunpack.c.l.b16 %v392
      %v865 = vunpack.c.l.b16 %v393
      %v866 = vunpack.c.l.b16 %v394
      %v867 = vunpack.c.l.b16 %v395
      %v868 = vunpack.c.l.b16 %v396
      %v869 = vunpack.c.l.b16 %v397
      %v870 = vunpack.c.l.b16 %v398
      %v871 = vunpack.c.l.b16 %v399
      %v872 = vunpack.c.l.b16 %v400
      %v873 = vunpack.c.l.b16 %v401
      %v874 = vunpack.c.l.b16 %v402
      %v875 = vunpack.c.l.b16 %v403
      %v876 = vunpack.c.l.b16 %v404
      %v877 = vunpack.c.l.b16 %v405
      %v878 = vunpack.c.l.b16 %v406
      %v879 = vunpack.c.l.b16 %v407
      %v880 = vunpack.c.l.b16 %v408
      %v881 = vunpack.c.l.b16 %v409
      %v882 = vpack.c.b16 %v739, %v738
      %v883 = vpack.c.b16 %v741, %v740
      %v884 = vpack.c.b16 %v743, %v742
      %v885 = vpack.c.b16 %v745, %v744
      %v886 = vpack.c.b16 %v747, %v746
      %v887 = vpack.c.b16 %v749, %v748
      %v888 = vpack.c.b16 %v751, %v750
      %v889 = vpack.c.b16 %v753, %v752
      %v890 = vpack.c.b16 %v755, %v754
      %v891 = vpack.c.b16 %v757, %v756
      %v892 = vpack.c.b16 %v759, %v758
      %v893 = vpack.c.b16 %v761, %v760
      %v894 = vpack.c.b16 %v763, %v762
      %v895 = vpack.c.b16 %v765, %v764
      %v896 = vpack.c.b16 %v767, %v766
      %v897 = vpack.c.b16 %v769, %v768
      %v898 = vpack.c.b16 %v771, %v770
      %v899 = vpack.c.b16 %v773, %v772
      %v900 = vpack.c.b16 %v775, %v774
      %v901 = vpack.c.b16 %v777, %v776
      %v902 = vpack.c.b16 %v779, %v778
      %v903 = vpack.c.b16 %v781, %v780
      %v904 = vpack.c.b16 %v783, %v782
      %v905 = vpack.c.b16 %v785, %v784
      %v906 = vpack.c.b16 %v787, %v786
      %v907 = vpack.c.b16 %v789, %v788
      %v908 = vpack.c.b16 %v791, %v790
      %v909 = vpack.c.b16 %v793, %v792
      %v910 = vpack.c.b16 %v795, %v794
      %v911 = vpack.c.b16 %v797, %v796
      %v912 = vpack.c.b16 %v799, %v798
      %v913 = vpack.c.b16 %v801, %v800
      %v914 = vpack.c.b16 %v803, %v802
      %v915 = vpack.c.b16 %v805, %v804
      %v916 = vpack.c.b16 %v807, %v806
      %v917 = vpack.c.b16 %v809, %v808
      %v918 = vpack.c.b16 %v811, %v810
      %v919 = vpack.c.b16 %v813, %v812
      %v920 = vpack.c.b16 %v815, %v814
      %v921 = vpack.c.b16 %v817, %v816
      %v922 = vpack.c.b16 %v819, %v818
      %v923 = vpack.c.b16 %v821, %v820
      %v924 = vpack.c.b16 %v823, %v822
      %v925 = vpack.c.b16 %v825, %v824
      %v926 = vpack.c.b16 %v827, %v826
      %v927 = vpack.c.b16 %v829, %v828
      %v928 = vpack.c.b16 %v831, %v830
      %v929 = vpack.c.b16 %v833, %v832
      %v930 = vpack.c.b16 %v835, %v834
      %v931 = vpack.c.b16 %v837, %v836
      %v932 = vpack.c.b16 %v839, %v838
      %v933 = vpack.c.b16 %v841, %v840
      %v934 = vpack.c.b16 %v843, %v842
      %v935 = vpack.c.b16 %v845, %v844
      %v936 = vpack.c.b16 %v847, %v846
      %v937 = vpack.c.b16 %v849, %v848
      %v938 = vpack.c.b16 %v851, %v850
      %v939 = vpack.c.b16 %v853, %v852
      %v940 = vpack.c.b16 %v855, %v854
      %v941 = vpack.c.b16 %v857, %v856
      %v942 = vpack.c.b16 %v859, %v858
      %v943 = vpack.c.b16 %v861, %v860
      %v944 = vpack.c.b16 %v863, %v862
      %v945 = vpack.c.b16 %v865, %v864
      %v946 = vpack.c.b16 %v867, %v866
      %v947 = vpack.c.b16 %v869, %v868
      %v948 = vpack.c.b16 %v871, %v870
      %v949 = vpack.c.b16 %v873, %v872
      %v950 = vpack.c.b16 %v875, %v874
      %v951 = vpack.c.b16 %v877, %v876
      %v952 = vpack.c.b16 %v879, %v878
      %v953 = vpack.c.b16 %v881, %v880
      %1026 = vmatprep.subr.bf16.mxu0 0
      %1027 = vmatpush1.bf16.msra.mxu0 %v889
      %1028 = vmatprep.subr.bf16.mxu0 0
      %1029 = vmatpush1.bf16.msra.mxu0 %v888
      %1030 = vmatprep.subr.bf16.mxu0 0
      %1031 = vmatpush1.bf16.msra.mxu0 %v887
      %1032 = vmatprep.subr.bf16.mxu0 0
      %1033 = vmatpush1.bf16.msra.mxu0 %v886
      %1034 = vmatprep.subr.bf16.mxu0 0
      %1035 = vmatpush1.bf16.msra.mxu0 %v885
      %1036 = vmatprep.subr.bf16.mxu0 0
      %1037 = vmatpush1.bf16.msra.mxu0 %v884
      %1038 = vmatprep.subr.bf16.mxu0 0
      %1039 = vmatpush1.bf16.msra.mxu0 %v883
      %1040 = vmatprep.subr.bf16.mxu0 0
      %1041 = vmatpush1.bf16.msra.mxu0 %v882
      %1042 = vmatprep.subr.bf16.mxu0 0
      %1043 = vmatpush2.bf16.msra.mxu0 %v897
      %1044 = vmatprep.subr.bf16.mxu0 0
      %1045 = vmatpush2.bf16.msra.mxu0 %v896
      %1046 = vmatprep.subr.bf16.mxu0 0
      %1047 = vmatpush2.bf16.msra.mxu0 %v895
      %1048 = vmatprep.subr.bf16.mxu0 0
      %1049 = vmatpush2.bf16.msra.mxu0 %v894
      %1050 = vmatprep.subr.bf16.mxu0 0
      %1051 = vmatpush2.bf16.msra.mxu0 %v893
      %1052 = vmatprep.subr.bf16.mxu0 0
      %1053 = vmatpush2.bf16.msra.mxu0 %v892
      %1054 = vmatprep.subr.bf16.mxu0 0
      %1055 = vmatpush2.bf16.msra.mxu0 %v891
      %1056 = vmatprep.subr.bf16.mxu0 0
      %1057 = vmatpush2.bf16.msra.mxu0 %v890
      %1058 = vmatprep.mubr.bf16.mxu0 %v523
      %1059 = vmatmul.mubr.bf16.gmra.mxu0 %v522
      %v1060 = vpop.f32.mrf.mxu0
      %v1061 = vadd.f32 0.0, %v1060
      %v1062 = vpop.f32.mrf.mxu0
      %v1063 = vpop.f32.mrf.mxu0
      %v1064 = vadd.f32 0.0, %v1063
      %v1065 = vpop.f32.mrf.mxu0
      %1066 = vmatprep.mubr.bf16.mxu0 %v532
      %1067 = vmatmul.mubr.bf16.gmra.mxu0 %v531
      %v1068 = vpop.f32.mrf.mxu0
      %v1069 = vadd.f32 0.0, %v1068
      %v1070 = vpop.f32.mrf.mxu0
      %v1071 = vpop.f32.mrf.mxu0
      %v1072 = vadd.f32 0.0, %v1071
      %v1073 = vpop.f32.mrf.mxu0
      %1074 = vmatprep.mubr.bf16.mxu0 %v541
      %1075 = vmatmul.mubr.bf16.gmra.mxu0 %v540
      %v1076 = vpop.f32.mrf.mxu0
      %v1077 = vadd.f32 0.0, %v1076
      %v1078 = vpop.f32.mrf.mxu0
      %v1079 = vpop.f32.mrf.mxu0
      %v1080 = vadd.f32 0.0, %v1079
      %v1081 = vpop.f32.mrf.mxu0
      %1082 = vmatprep.mubr.bf16.mxu0 %v550
      %1083 = vmatmul.mubr.bf16.gmra.mxu0 %v549
      %v1084 = vpop.f32.mrf.mxu0
      %v1085 = vadd.f32 0.0, %v1084
      %v1086 = vpop.f32.mrf.mxu0
      %v1087 = vpop.f32.mrf.mxu0
      %v1088 = vadd.f32 0.0, %v1087
      %v1089 = vpop.f32.mrf.mxu0
      %1090 = vdwg.mxu0
      %1091 = vmatprep.subr.bf16.mxu0 0
      %1092 = vmatpush1.bf16.msra.mxu0 %v905
      %1093 = vmatprep.subr.bf16.mxu0 0
      %1094 = vmatpush1.bf16.msra.mxu0 %v904
      %1095 = vmatprep.subr.bf16.mxu0 0
      %1096 = vmatpush1.bf16.msra.mxu0 %v903
      %1097 = vmatprep.subr.bf16.mxu0 0
      %1098 = vmatpush1.bf16.msra.mxu0 %v902
      %1099 = vmatprep.subr.bf16.mxu0 0
      %1100 = vmatpush1.bf16.msra.mxu0 %v901
      %1101 = vmatprep.subr.bf16.mxu0 0
      %1102 = vmatpush1.bf16.msra.mxu0 %v900
      %1103 = vmatprep.subr.bf16.mxu0 0
      %1104 = vmatpush1.bf16.msra.mxu0 %v899
      %1105 = vmatprep.subr.bf16.mxu0 0
      %1106 = vmatpush1.bf16.msra.mxu0 %v898
      %1107 = vmatprep.subr.bf16.mxu0 0
      %1108 = vmatpush2.bf16.msra.mxu0 %v913
      %1109 = vmatprep.subr.bf16.mxu0 0
      %1110 = vmatpush2.bf16.msra.mxu0 %v912
      %1111 = vmatprep.subr.bf16.mxu0 0
      %1112 = vmatpush2.bf16.msra.mxu0 %v911
      %1113 = vmatprep.subr.bf16.mxu0 0
      %1114 = vmatpush2.bf16.msra.mxu0 %v910
      %1115 = vmatprep.subr.bf16.mxu0 0
      %1116 = vmatpush2.bf16.msra.mxu0 %v909
      %1117 = vmatprep.subr.bf16.mxu0 0
      %1118 = vmatpush2.bf16.msra.mxu0 %v908
      %1119 = vmatprep.subr.bf16.mxu0 0
      %1120 = vmatpush2.bf16.msra.mxu0 %v907
      %1121 = vmatprep.subr.bf16.mxu0 0
      %1122 = vmatpush2.bf16.msra.mxu0 %v906
      %1123 = vmatprep.mubr.bf16.mxu0 %v525
      %1124 = vmatmul.mubr.bf16.gmra.mxu0 %v524
      %v1125 = vpop.f32.mrf.mxu0
      %v1126 = vadd.f32 %v1061, %v1125
      %v1127 = vpop.f32.mrf.mxu0
      %v1128 = vpop.f32.mrf.mxu0
      %v1129 = vadd.f32 %v1064, %v1128
      %v1130 = vpop.f32.mrf.mxu0
      %1131 = vmatprep.mubr.bf16.mxu0 %v534
      %1132 = vmatmul.mubr.bf16.gmra.mxu0 %v533
      %v1133 = vpop.f32.mrf.mxu0
      %v1134 = vadd.f32 %v1069, %v1133
      %v1135 = vpop.f32.mrf.mxu0
      %v1136 = vpop.f32.mrf.mxu0
      %v1137 = vadd.f32 %v1072, %v1136
      %v1138 = vpop.f32.mrf.mxu0
      %1139 = vmatprep.mubr.bf16.mxu0 %v543
      %1140 = vmatmul.mubr.bf16.gmra.mxu0 %v542
      %v1141 = vpop.f32.mrf.mxu0
      %v1142 = vadd.f32 %v1077, %v1141
      %v1143 = vpop.f32.mrf.mxu0
      %v1144 = vpop.f32.mrf.mxu0
      %v1145 = vadd.f32 %v1080, %v1144
      %v1146 = vpop.f32.mrf.mxu0
      %1147 = vmatprep.mubr.bf16.mxu0 %v552
      %1148 = vmatmul.mubr.bf16.gmra.mxu0 %v551
      %v1149 = vpop.f32.mrf.mxu0
      %v1150 = vadd.f32 %v1085, %v1149
      %v1151 = vpop.f32.mrf.mxu0
      %v1152 = vpop.f32.mrf.mxu0
      %v1153 = vadd.f32 %v1088, %v1152
      %v1154 = vpop.f32.mrf.mxu0
      %1155 = vdwg.mxu0
      %1156 = vmatprep.subr.bf16.mxu0 0
      %1157 = vmatpush1.bf16.msra.mxu0 %v921
      %1158 = vmatprep.subr.bf16.mxu0 0
      %1159 = vmatpush1.bf16.msra.mxu0 %v920
      %1160 = vmatprep.subr.bf16.mxu0 0
      %1161 = vmatpush1.bf16.msra.mxu0 %v919
      %1162 = vmatprep.subr.bf16.mxu0 0
      %1163 = vmatpush1.bf16.msra.mxu0 %v918
      %1164 = vmatprep.subr.bf16.mxu0 0
      %1165 = vmatpush1.bf16.msra.mxu0 %v917
      %1166 = vmatprep.subr.bf16.mxu0 0
      %1167 = vmatpush1.bf16.msra.mxu0 %v916
      %1168 = vmatprep.subr.bf16.mxu0 0
      %1169 = vmatpush1.bf16.msra.mxu0 %v915
      %1170 = vmatprep.subr.bf16.mxu0 0
      %1171 = vmatpush1.bf16.msra.mxu0 %v914
      %1172 = vmatprep.subr.bf16.mxu0 0
      %1173 = vmatpush2.bf16.msra.mxu0 %v929
      %1174 = vmatprep.subr.bf16.mxu0 0
      %1175 = vmatpush2.bf16.msra.mxu0 %v928
      %1176 = vmatprep.subr.bf16.mxu0 0
      %1177 = vmatpush2.bf16.msra.mxu0 %v927
      %1178 = vmatprep.subr.bf16.mxu0 0
      %1179 = vmatpush2.bf16.msra.mxu0 %v926
      %1180 = vmatprep.subr.bf16.mxu0 0
      %1181 = vmatpush2.bf16.msra.mxu0 %v925
      %1182 = vmatprep.subr.bf16.mxu0 0
      %1183 = vmatpush2.bf16.msra.mxu0 %v924
      %1184 = vmatprep.subr.bf16.mxu0 0
      %1185 = vmatpush2.bf16.msra.mxu0 %v923
      %1186 = vmatprep.subr.bf16.mxu0 0
      %1187 = vmatpush2.bf16.msra.mxu0 %v922
      %1188 = vmatprep.mubr.bf16.mxu0 %v527
      %1189 = vmatmul.mubr.bf16.gmra.mxu0 %v526
      %v1190 = vpop.f32.mrf.mxu0
      %v1191 = vadd.f32 %v1126, %v1190
      %v1192 = vpop.f32.mrf.mxu0
      %v1193 = vpop.f32.mrf.mxu0
      %v1194 = vadd.f32 %v1129, %v1193
      %v1195 = vpop.f32.mrf.mxu0
      %1196 = vmatprep.mubr.bf16.mxu0 %v536
      %1197 = vmatmul.mubr.bf16.gmra.mxu0 %v535
      %v1198 = vpop.f32.mrf.mxu0
      %v1199 = vadd.f32 %v1134, %v1198
      %v1200 = vpop.f32.mrf.mxu0
      %v1201 = vpop.f32.mrf.mxu0
      %v1202 = vadd.f32 %v1137, %v1201
      %v1203 = vpop.f32.mrf.mxu0
      %1204 = vmatprep.mubr.bf16.mxu0 %v545
      %1205 = vmatmul.mubr.bf16.gmra.mxu0 %v544
      %v1206 = vpop.f32.mrf.mxu0
      %v1207 = vadd.f32 %v1142, %v1206
      %v1208 = vpop.f32.mrf.mxu0
      %v1209 = vpop.f32.mrf.mxu0
      %v1210 = vadd.f32 %v1145, %v1209
      %v1211 = vpop.f32.mrf.mxu0
      %1212 = vmatprep.mubr.bf16.mxu0 %v554
      %1213 = vmatmul.mubr.bf16.gmra.mxu0 %v553
      %v1214 = vpop.f32.mrf.mxu0
      %v1215 = vadd.f32 %v1150, %v1214
      %v1216 = vpop.f32.mrf.mxu0
      %v1217 = vpop.f32.mrf.mxu0
      %v1218 = vadd.f32 %v1153, %v1217
      %v1219 = vpop.f32.mrf.mxu0
      %1220 = vdwg.mxu0
      %1221 = vmatprep.subr.bf16.mxu0 0
      %1222 = vmatpush1.bf16.msra.mxu0 %v937
      %1223 = vmatprep.subr.bf16.mxu0 0
      %1224 = vmatpush1.bf16.msra.mxu0 %v936
      %1225 = vmatprep.subr.bf16.mxu0 0
      %1226 = vmatpush1.bf16.msra.mxu0 %v935
      %1227 = vmatprep.subr.bf16.mxu0 0
      %1228 = vmatpush1.bf16.msra.mxu0 %v934
      %1229 = vmatprep.subr.bf16.mxu0 0
      %1230 = vmatpush1.bf16.msra.mxu0 %v933
      %1231 = vmatprep.subr.bf16.mxu0 0
      %1232 = vmatpush1.bf16.msra.mxu0 %v932
      %1233 = vmatprep.subr.bf16.mxu0 0
      %1234 = vmatpush1.bf16.msra.mxu0 %v931
      %1235 = vmatprep.subr.bf16.mxu0 0
      %1236 = vmatpush1.bf16.msra.mxu0 %v930
      %1237 = vmatprep.subr.bf16.mxu0 0
      %1238 = vmatpush2.bf16.msra.mxu0 %v945
      %1239 = vmatprep.subr.bf16.mxu0 0
      %1240 = vmatpush2.bf16.msra.mxu0 %v944
      %1241 = vmatprep.subr.bf16.mxu0 0
      %1242 = vmatpush2.bf16.msra.mxu0 %v943
      %1243 = vmatprep.subr.bf16.mxu0 0
      %1244 = vmatpush2.bf16.msra.mxu0 %v942
      %1245 = vmatprep.subr.bf16.mxu0 0
      %1246 = vmatpush2.bf16.msra.mxu0 %v941
      %1247 = vmatprep.subr.bf16.mxu0 0
      %1248 = vmatpush2.bf16.msra.mxu0 %v940
      %1249 = vmatprep.subr.bf16.mxu0 0
      %1250 = vmatpush2.bf16.msra.mxu0 %v939
      %1251 = vmatprep.subr.bf16.mxu0 0
      %1252 = vmatpush2.bf16.msra.mxu0 %v938
      %1253 = vmatprep.mubr.bf16.mxu0 %v529
      %1254 = vmatmul.mubr.bf16.gmra.mxu0 %v528
      %v1255 = vpop.f32.mrf.mxu0
      %v1256 = vadd.f32 %v1191, %v1255
      %v1257 = vpop.f32.mrf.mxu0
      %v1258 = vpop.f32.mrf.mxu0
      %v1259 = vadd.f32 %v1194, %v1258
      %v1260 = vpop.f32.mrf.mxu0
      %1261 = vmatprep.mubr.bf16.mxu0 %v538
      %1262 = vmatmul.mubr.bf16.gmra.mxu0 %v537
      %v1263 = vpop.f32.mrf.mxu0
      %v1264 = vadd.f32 %v1199, %v1263
      %v1265 = vpop.f32.mrf.mxu0
      %v1266 = vpop.f32.mrf.mxu0
      %v1267 = vadd.f32 %v1202, %v1266
      %v1268 = vpop.f32.mrf.mxu0
      %1269 = vmatprep.mubr.bf16.mxu0 %v547
      %1270 = vmatmul.mubr.bf16.gmra.mxu0 %v546
      %v1271 = vpop.f32.mrf.mxu0
      %v1272 = vadd.f32 %v1207, %v1271
      %v1273 = vpop.f32.mrf.mxu0
      %v1274 = vpop.f32.mrf.mxu0
      %v1275 = vadd.f32 %v1210, %v1274
      %v1276 = vpop.f32.mrf.mxu0
      %1277 = vmatprep.mubr.bf16.mxu0 %v556
      %1278 = vmatmul.mubr.bf16.gmra.mxu0 %v555
      %v1279 = vpop.f32.mrf.mxu0
      %v1280 = vadd.f32 %v1215, %v1279
      %v1281 = vpop.f32.mrf.mxu0
      %v1282 = vpop.f32.mrf.mxu0
      %v1283 = vadd.f32 %v1218, %v1282
      %v1284 = vpop.f32.mrf.mxu0
      %1285 = vdwg.mxu0
      %1286 = vmatprep.subr.bf16.mxu0 0
      %1287 = vmatpush1.bf16.msra.mxu0 %v953
      %1288 = vmatprep.subr.bf16.mxu0 0
      %1289 = vmatpush1.bf16.msra.mxu0 %v952
      %1290 = vmatprep.subr.bf16.mxu0 0
      %1291 = vmatpush1.bf16.msra.mxu0 %v951
      %1292 = vmatprep.subr.bf16.mxu0 0
      %1293 = vmatpush1.bf16.msra.mxu0 %v950
      %1294 = vmatprep.subr.bf16.mxu0 0
      %1295 = vmatpush1.bf16.msra.mxu0 %v949
      %1296 = vmatprep.subr.bf16.mxu0 0
      %1297 = vmatpush1.bf16.msra.mxu0 %v948
      %1298 = vmatprep.subr.bf16.mxu0 0
      %1299 = vmatpush1.bf16.msra.mxu0 %v947
      %1300 = vmatprep.subr.bf16.mxu0 0
      %1301 = vmatpush1.bf16.msra.mxu0 %v946
      %1302 = vmatprep.subr.bf16.mxu0 0
      %1303 = vmatpush2.bf16.msra.mxu0 0
      %1304 = vmatprep.subr.bf16.mxu0 0
      %1305 = vmatpush2.bf16.msra.mxu0 0
      %1306 = vmatprep.subr.bf16.mxu0 0
      %1307 = vmatpush2.bf16.msra.mxu0 0
      %1308 = vmatprep.subr.bf16.mxu0 0
      %1309 = vmatpush2.bf16.msra.mxu0 0
      %1310 = vmatprep.subr.bf16.mxu0 0
      %1311 = vmatpush2.bf16.msra.mxu0 0
      %1312 = vmatprep.subr.bf16.mxu0 0
      %1313 = vmatpush2.bf16.msra.mxu0 0
      %1314 = vmatprep.subr.bf16.mxu0 0
      %1315 = vmatpush2.bf16.msra.mxu0 0
      %1316 = vmatprep.subr.bf16.mxu0 0
      %1317 = vmatpush2.bf16.msra.mxu0 0
      %1318 = vmatprep.mubr.bf16.mxu0 0
      %1319 = vmatmul.mubr.bf16.gmra.mxu0 %v530
      %v1320 = vpop.f32.mrf.mxu0
      %v1321 = vadd.f32 %v1256, %v1320
      %v1322 = vpop.f32.mrf.mxu0
      %v1323 = vpop.f32.mrf.mxu0
      %v1324 = vadd.f32 %v1259, %v1323
      %v1325 = vpop.f32.mrf.mxu0
      %1326 = vmatprep.mubr.bf16.mxu0 0
      %1327 = vmatmul.mubr.bf16.gmra.mxu0 %v539
      %v1328 = vpop.f32.mrf.mxu0
      %v1329 = vadd.f32 %v1264, %v1328
      %v1330 = vpop.f32.mrf.mxu0
      %v1331 = vpop.f32.mrf.mxu0
      %v1332 = vadd.f32 %v1267, %v1331
      %v1333 = vpop.f32.mrf.mxu0
      %1334 = vmatprep.mubr.bf16.mxu0 0
      %1335 = vmatmul.mubr.bf16.gmra.mxu0 %v548
      %v1336 = vpop.f32.mrf.mxu0
      %v1337 = vadd.f32 %v1272, %v1336
      %v1338 = vpop.f32.mrf.mxu0
      %v1339 = vpop.f32.mrf.mxu0
      %v1340 = vadd.f32 %v1275, %v1339
      %v1341 = vpop.f32.mrf.mxu0
      %1342 = vmatprep.mubr.bf16.mxu0 0
      %1343 = vmatmul.mubr.bf16.gmra.mxu0 %v557
      %v1344 = vpop.f32.mrf.mxu0
      %v1345 = vadd.f32 %v1280, %v1344
      %v1346 = vpop.f32.mrf.mxu0
      %v1347 = vpop.f32.mrf.mxu0
      %v1348 = vadd.f32 %v1283, %v1347
      %v1349 = vpop.f32.mrf.mxu0
      %1350 = vdwg.mxu0
      %v1351 = vpack.c.bf16 %v1324, %v1321
      %v1352 = vpack.c.bf16 %v1332, %v1329
      %v1353 = vpack.c.bf16 %v1340, %v1337
      %v1354 = vpack.c.bf16 %v1348, %v1345
      %v1359 = vunpack.c.l.b16 %v1351
      %v1360 = vunpack.c.h.b16 %v1351
      %v1361 = vunpack.c.l.b16 %v1352
      %v1362 = vunpack.c.h.b16 %v1352
      %v1363 = vunpack.c.l.b16 %v1353
      %v1364 = vunpack.c.h.b16 %v1353
      %v1365 = vunpack.c.l.b16 %v1354
      %v1366 = vunpack.c.h.b16 %v1354
      %v1367 = vpack.c.b16 %v1359, %v1359
      %v1368 = vpack.c.b16 %v1360, %v1360
      %v1369 = vpack.c.b16 %v1361, %v1361
      %v1370 = vpack.c.b16 %v1362, %v1362
      %v1371 = vpack.c.b16 %v1363, %v1363
      %v1372 = vpack.c.b16 %v1364, %v1364
      %v1373 = vpack.c.b16 %v1365, %v1365
      %v1374 = vpack.c.b16 %v1366, %v1366
      %1383 = vst [vmem:[%s215] sm:$0xf] %v1367
      %1384 = vst [vmem:[%s215 + $0x4] sm:$0xf] %v1368
      %1385 = vst [vmem:[%s215 + $0x8] sm:$0xf] %v1369
      %1386 = vst [vmem:[%s215 + $0xc] sm:$0xf] %v1370
      %1387 = vst [vmem:[%s215 + $0x10] sm:$0xf] %v1371
      %1388 = vst [vmem:[%s215 + $0x14] sm:$0xf] %v1372
      %1389 = vst [vmem:[%s215 + $0x18] sm:$0xf] %v1373
      %1390 = vst [vmem:[%s215 + $0x1c] sm:$0xf] %v1374
      %v1391 = vadd.f32 %v1321, %v1324
      %v1392 = vadd.f32 %v1391, %v1329
      %v1393 = vadd.f32 %v1392, %v1332
      %v1394 = vadd.f32 %v1393, %v1337
      %v1395 = vadd.f32 %v1394, %v1340
      %v1396 = vadd.f32 %v1395, %v1345
      %v1397 = vadd.f32 %v1396, %v1348
      %v1398 = vrot.slane %v1397, 4
      %v1399 = vadd.f32 %v1397, %v1398
      %v1400 = vrot.slane %v1399, 2
      %v1401 = vadd.f32 %v1399, %v1400
      %v1402 = vrot.slane %v1401, 1
      %v1403 = vadd.f32 %v1401, %v1402
      %v1404 = vmul.f32 %v1321, %v1321
      %v1405 = vmul.f32 %v1324, %v1324
      %v1406 = vmul.f32 %v1329, %v1329
      %v1407 = vmul.f32 %v1332, %v1332
      %v1408 = vmul.f32 %v1337, %v1337
      %v1409 = vmul.f32 %v1340, %v1340
      %v1410 = vmul.f32 %v1345, %v1345
      %v1411 = vmul.f32 %v1348, %v1348
      %v1412 = vadd.f32 %v1404, %v1405
      %v1413 = vadd.f32 %v1412, %v1406
      %v1414 = vadd.f32 %v1413, %v1407
      %v1415 = vadd.f32 %v1414, %v1408
      %v1416 = vadd.f32 %v1415, %v1409
      %v1417 = vadd.f32 %v1416, %v1410
      %v1418 = vadd.f32 %v1417, %v1411
      %v1419 = vrot.slane %v1418, 4
      %v1420 = vadd.f32 %v1418, %v1419
      %v1421 = vrot.slane %v1420, 2
      %v1422 = vadd.f32 %v1420, %v1421
      %v1423 = vrot.slane %v1422, 1
      %v1424 = vadd.f32 %v1422, %v1423
      %1425 = vst [vmem:[%s220] sm:$0xff] %v1403
      %1426 = vst [vmem:[%s224] sm:$0xff] %v1424
      %s1427 = smul.u32 8, %s16
      %p1428 = scmp.lt.s32.totalorder %s1427, 15
      %s1429 = scalar_select %p1428, %s1427, 15
      %s1430 = smul.addr %s1429, 4
      %s1431 = scalar_lea.vmem %s2, %s1430
      %p1432 = scmp.lt.s32.totalorder %s16, 1
      %s1433 = scalar_select %p1432, %s16, 1
      %s1434 = smul.addr %s1433, 8
      %s1435 = scalar_lea.vmem %s3, %s1434
      %p1436 = scmp.lt.s32.totalorder %s16, 1
      %s1437 = scalar_select %p1436, %s16, 1
      %s1438 = smul.addr %s1437, 8
      %s1439 = scalar_lea.vmem %s4, %s1438
      // Predicated region
      $region29: #{basic_block_forward.5} parent=27 // pred_check
        %p1440 = pneg %p81
      $region30: #{basic_block_forward.5} parent=27 // pred_check_branch
        %1442 = sbr.rel (%p1440) target = $region32
      $region31: #{basic_block_forward.5} parent=27 // pred_region
        %s1443 = smul.u32 8, %s16
      $region32: #{basic_block_forward.5} parent=27 // pred_fallthru
        _
      // Predicated region
      $region33: #{basic_block_forward.5} parent=27 // pred_check
        %p1444 = pneg %p107
      $region34: #{basic_block_forward.5} parent=27 // pred_check_branch
        %1446 = sbr.rel (%p1444) target = $region36
      $region35: #{basic_block_forward.5} parent=27 // pred_region
        _
      $region36: #{basic_block_forward.5} parent=27 // pred_fallthru
        _
      // Predicated region
      $region37: #{basic_block_forward.5} parent=27 // pred_check
        %p1447 = pneg %p133
      $region38: #{basic_block_forward.5} parent=27 // pred_check_branch
        %1449 = sbr.rel (%p1447) target = $region40
      $region39: #{basic_block_forward.5} parent=27 // pred_region
        _
      $region40: #{basic_block_forward.5} parent=27 // pred_fallthru
        _
    $region28: #{basic_block_forward.5} parent=5 // pred_fallthru
      _
    %p1450 = scmp.le.s32.totalorder 2, %s11
    // Predicated region
    $region41: #{basic_block_forward.5} parent=5 // pred_check
      %p1451 = pneg %p1450
    $region42: #{basic_block_forward.5} parent=5 // pred_check_branch
      %1453 = sbr.rel (%p1451) target = $region44
    $region43: #{basic_block_forward.5} parent=5 // pred_region
      %s1454 = ssub.s32 %s11, 2
      // Predicated region
      $region45: #{basic_block_forward.5} parent=43 // pred_check
        %p1455 = pneg %p87
      $region46: #{basic_block_forward.5} parent=43 // pred_check_branch
        %1457 = sbr.rel (%p1455) target = $region48
      $region47: #{basic_block_forward.5} parent=43 // pred_region
        %s1458 = smul.u32 8, %s17
        %p1459 = scmp.lt.s32.totalorder %s1458, 15
        %s1460 = scalar_select %p1459, %s1458, 15
        %s1461 = smul.addr %s1460, 4
        %s1462 = scalar_lea.vmem %s2, %s1461
      $region48: #{basic_block_forward.5} parent=43 // pred_fallthru
        _
      // Predicated region
      $region49: #{basic_block_forward.5} parent=43 // pred_check
        %p1463 = pneg %p113
      $region50: #{basic_block_forward.5} parent=43 // pred_check_branch
        %1465 = sbr.rel (%p1463) target = $region52
      $region51: #{basic_block_forward.5} parent=43 // pred_region
        %p1466 = scmp.lt.s32.totalorder %s17, 1
        %s1467 = scalar_select %p1466, %s17, 1
        %s1468 = smul.addr %s1467, 8
        %s1469 = scalar_lea.vmem %s3, %s1468
      $region52: #{basic_block_forward.5} parent=43 // pred_fallthru
        _
      // Predicated region
      $region53: #{basic_block_forward.5} parent=43 // pred_check
        %p1470 = pneg %p139
      $region54: #{basic_block_forward.5} parent=43 // pred_check_branch
        %1472 = sbr.rel (%p1470) target = $region56
      $region55: #{basic_block_forward.5} parent=43 // pred_region
        %p1473 = scmp.lt.s32.totalorder %s17, 1
        %s1474 = scalar_select %p1473, %s17, 1
        %s1475 = smul.addr %s1474, 8
        %s1476 = scalar_lea.vmem %s4, %s1475
      $region56: #{basic_block_forward.5} parent=43 // pred_fallthru
        _
    $region44: #{basic_block_forward.5} parent=5 // pred_fallthru
      _
  $region6: #{basic_block_forward.5} parent=0 // loop_footer
    %s15 = sadd.s32 1, %s11
  $region7: #{basic_block_forward.5} parent=0 // loop_footer_branch
    %10 = sbr.rel target = $region3
  $region8: #{basic_block_forward.5} parent=0 // loop_exit
    _

</llo_original>
